<compile_context>
chip_gen: v6e
topology: v6e:2x2x1
jax: 0.10.0
libtpu: 0.0.40
codegen_flags: <defaults>
</compile_context>

<pallas_src>
import jax
import jax.numpy as jnp
from jax.experimental import pallas as pl
from jax.experimental.pallas import tpu as pltpu


def _round_up(n, m):
    return ((n + m - 1) // m) * m


def gru_kernel(lens_ref, gi_ref, whh_ref, bhn_ref, out_ref, hfinal_ref, h_scratch):
    """One grid step = one chunk of Tc timesteps, looped inside the kernel.

    lens_ref : (Bp, 1)        int32  valid lengths (padded rows = 0)
    gi_ref   : (Tc, Bp, 3*Hp) f32    precomputed x@W_ih + folded biases
    whh_ref  : (Hp, 3*Hp)     f32    fused recurrent weight (r|z|n, lane-padded)
    bhn_ref  : (1, Hp)        f32    b_hh of the n gate (cannot be pre-folded)
    out_ref  : (Tc, Bp, Hp)   f32    padded-sequence outputs for this chunk
    hfinal   : (1, Bp, Hp)    f32    final hidden state (written on last chunk)
    h_scratch: (Bp, Hp)       f32    hidden state carried across chunks
    """
    c = pl.program_id(0)
    Tc, Bp, _ = gi_ref.shape
    Hp = h_scratch.shape[-1]

    @pl.when(c == 0)
    def _():
        h_scratch[...] = jnp.zeros_like(h_scratch)

    # Hoisted loads / broadcasts (invariant across the time loop).
    lens = lens_ref[...]                                 # (Bp, 1) int32
    whh = whh_ref[...]                                   # (Hp, 3*Hp)
    bhn = jnp.broadcast_to(bhn_ref[...], (Bp, Hp))       # (Bp, Hp)
    t0 = c * Tc

    def step(i, h):
        gi = gi_ref[i]                                   # (Bp, 3*Hp), biases folded
        # Single fused recurrent matmul instead of 3 per-gate dots.
        gh = jnp.dot(h, whh, preferred_element_type=jnp.float32)  # (Bp, 3*Hp)

        # Gate order follows torch.nn.GRU: r (reset), z (update), n (new).
        r = jax.nn.sigmoid(gi[:, :Hp] + gh[:, :Hp])
        z = jax.nn.sigmoid(gi[:, Hp:2 * Hp] + gh[:, Hp:2 * Hp])
        n = jnp.tanh(gi[:, 2 * Hp:] + r * (gh[:, 2 * Hp:] + bhn))
        h_new = (1.0 - z) * n + z * h

        # packed-sequence semantics: padded steps emit 0, freeze hidden state.
        valid = (t0 + i) < lens                          # (Bp, 1) bool
        out_ref[i] = jnp.where(valid, h_new, 0.0).astype(out_ref.dtype)
        return jnp.where(valid, h_new, h)

    h_last = jax.lax.fori_loop(0, Tc, step, h_scratch[...], unroll=Tc <= 32)
    h_scratch[...] = h_last

    @pl.when(c == pl.num_programs(0) - 1)
    def _():
        hfinal_ref[0] = h_last.astype(hfinal_ref.dtype)


def gru_pallas(x_tbe, lens, wih, whh, bih, bhh, *, time_chunk=128):
    """x_tbe: (T, B, E) f32 time-major embedded input.

    wih: (3, E, H), whh: (3, H, H), bih/bhh: (3, H), stacked gate order r,z,n.
    Returns ((T, B, H) output, (1, B, H) final hidden).
    """
    T, B, E = x_tbe.shape
    H = whh.shape[-1]
    f32 = jnp.float32

    LANE, SUB = 128, 8
    Hp = _round_up(H, LANE)          # lane-dense hidden width
    Bp = _round_up(B, SUB)           # sublane-aligned batch
    Tc = min(time_chunk, T)          # timesteps per kernel invocation
    Tp = _round_up(T, Tc)
    num_chunks = Tp // Tc

    # ---- fuse + lane-pad the weights: W_ih (E, 3*Hp), W_hh (Hp, 3*Hp) ----
    wih_cat = jnp.zeros((E, 3 * Hp), f32)
    whh_cat = jnp.zeros((Hp, 3 * Hp), f32)
    b_in = jnp.zeros((3 * Hp,), f32)
    for g in range(3):
        wih_cat = wih_cat.at[:, g * Hp:g * Hp + H].set(wih[g])
        whh_cat = whh_cat.at[:H, g * Hp:g * Hp + H].set(whh[g])
    # Fold b_ih into the input projection for all gates, and b_hh for r,z.
    b_in = b_in.at[0 * Hp:0 * Hp + H].set(bih[0] + bhh[0])
    b_in = b_in.at[1 * Hp:1 * Hp + H].set(bih[1] + bhh[1])
    b_in = b_in.at[2 * Hp:2 * Hp + H].set(bih[2])
    bhn = jnp.zeros((1, Hp), f32).at[0, :H].set(bhh[2])   # n-gate b_hh stays in-kernel

    # ---- hoist the input projection out of the recurrence (one big matmul) ----
    gi = x_tbe.reshape(T * B, E).astype(f32) @ wih_cat + b_in     # (T*B, 3*Hp)
    gi = gi.reshape(T, B, 3 * Hp)
    gi = jnp.pad(gi, ((0, Tp - T), (0, Bp - B), (0, 0)))          # (Tp, Bp, 3*Hp)

    # Padded batch rows get lens=0 -> always masked (zero output, frozen h=0).
    lens_pad = jnp.zeros((Bp, 1), jnp.int32).at[:B, 0].set(lens.astype(jnp.int32))

    grid_spec = pltpu.PrefetchScalarGridSpec(
        num_scalar_prefetch=0,
        grid=(num_chunks,),
        in_specs=[
            pl.BlockSpec((Bp, 1), lambda c: (0, 0)),              # lens
            pl.BlockSpec((Tc, Bp, 3 * Hp), lambda c: (c, 0, 0)),  # precomputed GI chunk
            pl.BlockSpec((Hp, 3 * Hp), lambda c: (0, 0)),         # fused W_hh
            pl.BlockSpec((1, Hp), lambda c: (0, 0)),              # n-gate b_hh
        ],
        out_specs=[
            pl.BlockSpec((Tc, Bp, Hp), lambda c: (c, 0, 0)),      # output chunk (lane-dense)
            pl.BlockSpec((1, Bp, Hp), lambda c: (0, 0, 0)),       # final hidden (resident)
        ],
        scratch_shapes=[pltpu.VMEM((Bp, Hp), f32)],               # carried hidden state
    )

    out, hidden = pl.pallas_call(
        gru_kernel,
        out_shape=(
            jax.ShapeDtypeStruct((Tp, Bp, Hp), f32),
            jax.ShapeDtypeStruct((1, Bp, Hp), f32),
        ),
        grid_spec=grid_spec,
        compiler_params=pltpu.CompilerParams(
            dimension_semantics=("arbitrary",),   # sequential recurrence over chunks
        ),
    )(lens_pad, gi, whh_cat, bhn)

    # Strip lane/sublane/time padding.
    return out[:T, :B, :H], hidden[:, :B, :H]


def encoder_forward(tokens, lens, params):
    """Full Encoder.forward: embedding + packed GRU (time-major outputs)."""
    emb = jnp.take(params["embedding"], tokens, axis=0)            # (B, S, E)
    x_tbe = jnp.transpose(emb, (1, 0, 2)).astype(jnp.float32)      # (S, B, E)
    return gru_pallas(x_tbe, lens,
                      params["wih"], params["whh"],
                      params["bih"], params["bhh"])


def gru_reference(x_tbe, lens, wih, whh, bih, bhh):
    """Pure-JAX reference with identical packed-sequence semantics."""
    T, B, E = x_tbe.shape
    H = whh.shape[-1]
    h = jnp.zeros((B, H), jnp.float32)
    outs = []
    for t in range(T):
        x_t = x_tbe[t]
        r = jax.nn.sigmoid(x_t @ wih[0] + bih[0] + h @ whh[0] + bhh[0])
        z = jax.nn.sigmoid(x_t @ wih[1] + bih[1] + h @ whh[1] + bhh[1])
        n = jnp.tanh(x_t @ wih[2] + bih[2] + r * (h @ whh[2] + bhh[2]))
        h_new = (1.0 - z) * n + z * h
        valid = (t < lens)[:, None]
        outs.append(jnp.where(valid, h_new, 0.0))
        h = jnp.where(valid, h_new, h)
    return jnp.stack(outs, axis=0), h[None]


def init_params(key, vocab_size, embedding_dim, enc_units):
    k_emb, k_wih, k_whh, k_bih, k_bhh = jax.random.split(key, 5)
    bound = 1.0 / jnp.sqrt(enc_units)
    return {
        # nn.Embedding default init: N(0, 1)
        "embedding": jax.random.normal(k_emb, (vocab_size, embedding_dim), jnp.float32),
        # nn.GRU default init: U(-1/sqrt(H), 1/sqrt(H)); stored stacked (r,z,n)
        # and pre-transposed so the kernel computes x @ W.
        "wih": jax.random.uniform(k_wih, (3, embedding_dim, enc_units),
                                  jnp.float32, -bound, bound),
        "whh": jax.random.uniform(k_whh, (3, enc_units, enc_units),
                                  jnp.float32, -bound, bound),
        "bih": jax.random.uniform(k_bih, (3, enc_units), jnp.float32, -bound, bound),
        "bhh": jax.random.uniform(k_bhh, (3, enc_units), jnp.float32, -bound, bound),
    }


if __name__ == "__main__":
    vocab_size, embedding_dim, enc_units = 50, 32, 32
    batch_sz, seq_len = 4, 8

    key = jax.random.PRNGKey(0)
    k_params, k_tok = jax.random.split(key)
    params = init_params(k_params, vocab_size, embedding_dim, enc_units)

    tokens = jax.random.randint(k_tok, (batch_sz, seq_len), 0, vocab_size, jnp.int32)
    # pack_padded_sequence requires descending lengths; max length == seq_len
    lens = jnp.array([8, 6, 5, 3], dtype=jnp.int32)

    output, hidden = jax.block_until_ready(encoder_forward(tokens, lens, params))

    # Correctness check against pure-JAX reference of the same semantics.
    emb = jnp.take(params["embedding"], tokens, axis=0)
    x_tbe = jnp.transpose(emb, (1, 0, 2)).astype(jnp.float32)
    ref_out, ref_hidden = gru_reference(x_tbe, lens,
                                        params["wih"], params["whh"],
                                        params["bih"], params["bhh"])

    assert output.shape == (seq_len, batch_sz, enc_units)
    assert hidden.shape == (1, batch_sz, enc_units)
    assert jnp.allclose(output, ref_out, atol=2e-5, rtol=1e-4)
    assert jnp.allclose(hidden, ref_hidden, atol=2e-5, rtol=1e-4)

    print("KERNEL_OK")
</pallas_src>

<mosaic_0001>
module attributes {stable_mosaic.version = 11 : i64} {
  func.func @gru_kernel(%arg0: i32, %arg1: memref<8x1xi32, #tpu.memory_space<vmem>>, %arg2: memref<8x8x384xf32, #tpu.memory_space<vmem>>, %arg3: memref<128x384xf32, #tpu.memory_space<vmem>>, %arg4: memref<1x128xf32, #tpu.memory_space<vmem>>, %arg5: memref<8x8x128xf32, #tpu.memory_space<vmem>>, %arg6: memref<1x8x128xf32, #tpu.memory_space<vmem>>, %arg7: memref<8x128xf32, #tpu.memory_space<vmem>>) attributes {dimension_semantics = [#tpu.dimension_semantics<arbitrary>], iteration_bounds = array<i64: 1>, scalar_prefetch = 0 : i64, scratch_operands = 1 : i64, tpu.core_type = #tpu.core_type<tc>, window_params = [{pipeline_mode = #tpu.pipeline_mode<synchronous>, transform_indices = @transform_0, window_bounds = array<i64: 8, 1>}, {transform_indices = @transform_1, window_bounds = array<i64: 8, 8, 384>}, {pipeline_mode = #tpu.pipeline_mode<synchronous>, transform_indices = @transform_2, window_bounds = array<i64: 128, 384>}, {pipeline_mode = #tpu.pipeline_mode<synchronous>, transform_indices = @transform_3, window_bounds = array<i64: 1, 128>}, {transform_indices = @transform_4, window_bounds = array<i64: 8, 8, 128>}, {pipeline_mode = #tpu.pipeline_mode<synchronous>, transform_indices = @transform_5, window_bounds = array<i64: 1, 8, 128>}]} {
    %c0_i32 = arith.constant 0 : i32
    %0 = arith.cmpi eq, %arg0, %c0_i32 : i32
    %1 = arith.extui %0 : i1 to i32
    %c0_i32_0 = arith.constant 0 : i32
    %2 = arith.cmpi ne, %1, %c0_i32_0 : i32
    scf.if %2 {
      %cst_85 = arith.constant 0.000000e+00 : f32
      %374 = vector.broadcast %cst_85 : f32 to vector<8x128xf32>
      %c0_86 = arith.constant 0 : index
      %c0_87 = arith.constant 0 : index
      %375 = vector.load %arg7[%c0_86, %c0_87] : memref<8x128xf32, #tpu.memory_space<vmem>>, vector<8x128xf32>
      tpu.vector_store %arg7[%c0_86, %c0_87], %374 {strides = array<i32>} : memref<8x128xf32, #tpu.memory_space<vmem>>, vector<8x128xf32>,
    } else {
    }
    %c0 = arith.constant 0 : index
    %c0_1 = arith.constant 0 : index
    %3 = vector.load %arg1[%c0, %c0_1] : memref<8x1xi32, #tpu.memory_space<vmem>>, vector<8x1xi32>
    %c0_2 = arith.constant 0 : index
    %c0_3 = arith.constant 0 : index
    %4 = vector.load %arg3[%c0_2, %c0_3] : memref<128x384xf32, #tpu.memory_space<vmem>>, vector<128x384xf32>
    %c0_4 = arith.constant 0 : index
    %c0_5 = arith.constant 0 : index
    %5 = vector.load %arg4[%c0_4, %c0_5] : memref<1x128xf32, #tpu.memory_space<vmem>>, vector<1x128xf32>
    %6 = vector.shape_cast %5 : vector<1x128xf32> to vector<1x128xf32>
    %7 = vector.broadcast %6 : vector<1x128xf32> to vector<8x128xf32>
    %c8_i32 = arith.constant 8 : i32
    %8 = arith.muli %arg0, %c8_i32 : i32
    %c0_6 = arith.constant 0 : index
    %c0_7 = arith.constant 0 : index
    %9 = vector.load %arg7[%c0_6, %c0_7] : memref<8x128xf32, #tpu.memory_space<vmem>>, vector<8x128xf32>
    %c0_i32_8 = arith.constant 0 : i32
    %10 = arith.index_cast %c0_i32_8 : i32 to index
    %c0_9 = arith.constant 0 : index
    %c0_10 = arith.constant 0 : index
    %11 = vector.load %arg2[%10, %c0_9, %c0_10] : memref<8x8x384xf32, #tpu.memory_space<vmem>>, vector<1x8x384xf32>
    %12 = vector.shape_cast %11 : vector<1x8x384xf32> to vector<8x384xf32>
    %cst = arith.constant dense<0.000000e+00> : vector<8x384xf32>
    %13 = tpu.matmul %9, %4, %cst {dimension_numbers = #tpu.dot_dimension_numbers<[1], [0], [0], [1], [0, 0, 1, 1], [], []>} : vector<8x128xf32>, vector<128x384xf32>, vector<8x384xf32> -> vector<8x384xf32>
    %14 = vector.extract_strided_slice %12 {offsets = [0, 0], sizes = [8, 128], strides = [1, 1]} : vector<8x384xf32> to vector<8x128xf32>
    %15 = vector.extract_strided_slice %13 {offsets = [0, 0], sizes = [8, 128], strides = [1, 1]} : vector<8x384xf32> to vector<8x128xf32>
    %16 = arith.addf %14, %15 : vector<8x128xf32>
    %17 = arith.negf %16 : vector<8x128xf32>
    %18 = math.exp %17 : vector<8x128xf32>
    %cst_11 = arith.constant 1.000000e+00 : f32
    %19 = vector.broadcast %cst_11 : f32 to vector<8x128xf32>
    %20 = arith.addf %19, %18 : vector<8x128xf32>
    %21 = arith.divf %19, %20 : vector<8x128xf32>
    %22 = vector.extract_strided_slice %12 {offsets = [0, 128], sizes = [8, 128], strides = [1, 1]} : vector<8x384xf32> to vector<8x128xf32>
    %23 = vector.extract_strided_slice %13 {offsets = [0, 128], sizes = [8, 128], strides = [1, 1]} : vector<8x384xf32> to vector<8x128xf32>
    %24 = arith.addf %22, %23 : vector<8x128xf32>
    %25 = arith.negf %24 : vector<8x128xf32>
    %26 = math.exp %25 : vector<8x128xf32>
    %cst_12 = arith.constant 1.000000e+00 : f32
    %27 = vector.broadcast %cst_12 : f32 to vector<8x128xf32>
    %28 = arith.addf %27, %26 : vector<8x128xf32>
    %29 = arith.divf %27, %28 : vector<8x128xf32>
    %30 = vector.extract_strided_slice %12 {offsets = [0, 256], sizes = [8, 128], strides = [1, 1]} : vector<8x384xf32> to vector<8x128xf32>
    %31 = vector.extract_strided_slice %13 {offsets = [0, 256], sizes = [8, 128], strides = [1, 1]} : vector<8x384xf32> to vector<8x128xf32>
    %32 = arith.addf %31, %7 : vector<8x128xf32>
    %33 = arith.mulf %21, %32 : vector<8x128xf32>
    %34 = arith.addf %30, %33 : vector<8x128xf32>
    %35 = math.tanh %34 : vector<8x128xf32>
    %cst_13 = arith.constant 1.000000e+00 : f32
    %36 = vector.broadcast %cst_13 : f32 to vector<8x128xf32>
    %37 = arith.subf %36, %29 : vector<8x128xf32>
    %38 = arith.mulf %37, %35 : vector<8x128xf32>
    %39 = arith.mulf %29, %9 : vector<8x128xf32>
    %40 = arith.addf %38, %39 : vector<8x128xf32>
    %41 = arith.addi %8, %c0_i32_8 : i32
    %42 = vector.broadcast %41 : i32 to vector<8x1xi32>
    %43 = arith.cmpi slt, %42, %3 : vector<8x1xi32>
    %cst_14 = arith.constant 0.000000e+00 : f32
    %44 = vector.shape_cast %43 : vector<8x1xi1> to vector<8x1xi1>
    %45 = vector.broadcast %44 : vector<8x1xi1> to vector<8x128xi1>
    %46 = vector.broadcast %cst_14 : f32 to vector<8x128xf32>
    %47 = arith.select %45, %40, %46 : vector<8x128xi1>, vector<8x128xf32>
    %48 = arith.index_cast %c0_i32_8 : i32 to index
    %c0_15 = arith.constant 0 : index
    %c0_16 = arith.constant 0 : index
    %49 = vector.load %arg5[%48, %c0_15, %c0_16] : memref<8x8x128xf32, #tpu.memory_space<vmem>>, vector<1x8x128xf32>
    %50 = vector.shape_cast %49 : vector<1x8x128xf32> to vector<8x128xf32>
    %51 = vector.shape_cast %47 : vector<8x128xf32> to vector<1x8x128xf32>
    tpu.vector_store %arg5[%48, %c0_15, %c0_16], %51 {strides = array<i32>} : memref<8x8x128xf32, #tpu.memory_space<vmem>>, vector<1x8x128xf32>,
    %52 = vector.shape_cast %43 : vector<8x1xi1> to vector<8x1xi1>
    %53 = vector.broadcast %52 : vector<8x1xi1> to vector<8x128xi1>
    %54 = arith.select %53, %40, %9 : vector<8x128xi1>, vector<8x128xf32>
    %c1_i32 = arith.constant 1 : i32
    %55 = arith.index_cast %c1_i32 : i32 to index
    %c0_17 = arith.constant 0 : index
    %c0_18 = arith.constant 0 : index
    %56 = vector.load %arg2[%55, %c0_17, %c0_18] : memref<8x8x384xf32, #tpu.memory_space<vmem>>, vector<1x8x384xf32>
    %57 = vector.shape_cast %56 : vector<1x8x384xf32> to vector<8x384xf32>
    %cst_19 = arith.constant dense<0.000000e+00> : vector<8x384xf32>
    %58 = tpu.matmul %54, %4, %cst_19 {dimension_numbers = #tpu.dot_dimension_numbers<[1], [0], [0], [1], [0, 0, 1, 1], [], []>} : vector<8x128xf32>, vector<128x384xf32>, vector<8x384xf32> -> vector<8x384xf32>
    %59 = vector.extract_strided_slice %57 {offsets = [0, 0], sizes = [8, 128], strides = [1, 1]} : vector<8x384xf32> to vector<8x128xf32>
    %60 = vector.extract_strided_slice %58 {offsets = [0, 0], sizes = [8, 128], strides = [1, 1]} : vector<8x384xf32> to vector<8x128xf32>
    %61 = arith.addf %59, %60 : vector<8x128xf32>
    %62 = arith.negf %61 : vector<8x128xf32>
    %63 = math.exp %62 : vector<8x128xf32>
    %cst_20 = arith.constant 1.000000e+00 : f32
    %64 = vector.broadcast %cst_20 : f32 to vector<8x128xf32>
    %65 = arith.addf %64, %63 : vector<8x128xf32>
    %66 = arith.divf %64, %65 : vector<8x128xf32>
    %67 = vector.extract_strided_slice %57 {offsets = [0, 128], sizes = [8, 128], strides = [1, 1]} : vector<8x384xf32> to vector<8x128xf32>
    %68 = vector.extract_strided_slice %58 {offsets = [0, 128], sizes = [8, 128], strides = [1, 1]} : vector<8x384xf32> to vector<8x128xf32>
    %69 = arith.addf %67, %68 : vector<8x128xf32>
    %70 = arith.negf %69 : vector<8x128xf32>
    %71 = math.exp %70 : vector<8x128xf32>
    %cst_21 = arith.constant 1.000000e+00 : f32
    %72 = vector.broadcast %cst_21 : f32 to vector<8x128xf32>
    %73 = arith.addf %72, %71 : vector<8x128xf32>
    %74 = arith.divf %72, %73 : vector<8x128xf32>
    %75 = vector.extract_strided_slice %57 {offsets = [0, 256], sizes = [8, 128], strides = [1, 1]} : vector<8x384xf32> to vector<8x128xf32>
    %76 = vector.extract_strided_slice %58 {offsets = [0, 256], sizes = [8, 128], strides = [1, 1]} : vector<8x384xf32> to vector<8x128xf32>
    %77 = arith.addf %76, %7 : vector<8x128xf32>
    %78 = arith.mulf %66, %77 : vector<8x128xf32>
    %79 = arith.addf %75, %78 : vector<8x128xf32>
    %80 = math.tanh %79 : vector<8x128xf32>
    %cst_22 = arith.constant 1.000000e+00 : f32
    %81 = vector.broadcast %cst_22 : f32 to vector<8x128xf32>
    %82 = arith.subf %81, %74 : vector<8x128xf32>
    %83 = arith.mulf %82, %80 : vector<8x128xf32>
    %84 = arith.mulf %74, %54 : vector<8x128xf32>
    %85 = arith.addf %83, %84 : vector<8x128xf32>
    %86 = arith.addi %8, %c1_i32 : i32
    %87 = vector.broadcast %86 : i32 to vector<8x1xi32>
    %88 = arith.cmpi slt, %87, %3 : vector<8x1xi32>
    %cst_23 = arith.constant 0.000000e+00 : f32
    %89 = vector.shape_cast %88 : vector<8x1xi1> to vector<8x1xi1>
    %90 = vector.broadcast %89 : vector<8x1xi1> to vector<8x128xi1>
    %91 = vector.broadcast %cst_23 : f32 to vector<8x128xf32>
    %92 = arith.select %90, %85, %91 : vector<8x128xi1>, vector<8x128xf32>
    %93 = arith.index_cast %c1_i32 : i32 to index
    %c0_24 = arith.constant 0 : index
    %c0_25 = arith.constant 0 : index
    %94 = vector.load %arg5[%93, %c0_24, %c0_25] : memref<8x8x128xf32, #tpu.memory_space<vmem>>, vector<1x8x128xf32>
    %95 = vector.shape_cast %94 : vector<1x8x128xf32> to vector<8x128xf32>
    %96 = vector.shape_cast %92 : vector<8x128xf32> to vector<1x8x128xf32>
    tpu.vector_store %arg5[%93, %c0_24, %c0_25], %96 {strides = array<i32>} : memref<8x8x128xf32, #tpu.memory_space<vmem>>, vector<1x8x128xf32>,
    %97 = vector.shape_cast %88 : vector<8x1xi1> to vector<8x1xi1>
    %98 = vector.broadcast %97 : vector<8x1xi1> to vector<8x128xi1>
    %99 = arith.select %98, %85, %54 : vector<8x128xi1>, vector<8x128xf32>
    %c2_i32 = arith.constant 2 : i32
    %100 = arith.index_cast %c2_i32 : i32 to index
    %c0_26 = arith.constant 0 : index
    %c0_27 = arith.constant 0 : index
    %101 = vector.load %arg2[%100, %c0_26, %c0_27] : memref<8x8x384xf32, #tpu.memory_space<vmem>>, vector<1x8x384xf32>
    %102 = vector.shape_cast %101 : vector<1x8x384xf32> to vector<8x384xf32>
    %cst_28 = arith.constant dense<0.000000e+00> : vector<8x384xf32>
    %103 = tpu.matmul %99, %4, %cst_28 {dimension_numbers = #tpu.dot_dimension_numbers<[1], [0], [0], [1], [0, 0, 1, 1], [], []>} : vector<8x128xf32>, vector<128x384xf32>, vector<8x384xf32> -> vector<8x384xf32>
    %104 = vector.extract_strided_slice %102 {offsets = [0, 0], sizes = [8, 128], strides = [1, 1]} : vector<8x384xf32> to vector<8x128xf32>
    %105 = vector.extract_strided_slice %103 {offsets = [0, 0], sizes = [8, 128], strides = [1, 1]} : vector<8x384xf32> to vector<8x128xf32>
    %106 = arith.addf %104, %105 : vector<8x128xf32>
    %107 = arith.negf %106 : vector<8x128xf32>
    %108 = math.exp %107 : vector<8x128xf32>
    %cst_29 = arith.constant 1.000000e+00 : f32
    %109 = vector.broadcast %cst_29 : f32 to vector<8x128xf32>
    %110 = arith.addf %109, %108 : vector<8x128xf32>
    %111 = arith.divf %109, %110 : vector<8x128xf32>
    %112 = vector.extract_strided_slice %102 {offsets = [0, 128], sizes = [8, 128], strides = [1, 1]} : vector<8x384xf32> to vector<8x128xf32>
    %113 = vector.extract_strided_slice %103 {offsets = [0, 128], sizes = [8, 128], strides = [1, 1]} : vector<8x384xf32> to vector<8x128xf32>
    %114 = arith.addf %112, %113 : vector<8x128xf32>
    %115 = arith.negf %114 : vector<8x128xf32>
    %116 = math.exp %115 : vector<8x128xf32>
    %cst_30 = arith.constant 1.000000e+00 : f32
    %117 = vector.broadcast %cst_30 : f32 to vector<8x128xf32>
    %118 = arith.addf %117, %116 : vector<8x128xf32>
    %119 = arith.divf %117, %118 : vector<8x128xf32>
    %120 = vector.extract_strided_slice %102 {offsets = [0, 256], sizes = [8, 128], strides = [1, 1]} : vector<8x384xf32> to vector<8x128xf32>
    %121 = vector.extract_strided_slice %103 {offsets = [0, 256], sizes = [8, 128], strides = [1, 1]} : vector<8x384xf32> to vector<8x128xf32>
    %122 = arith.addf %121, %7 : vector<8x128xf32>
    %123 = arith.mulf %111, %122 : vector<8x128xf32>
    %124 = arith.addf %120, %123 : vector<8x128xf32>
    %125 = math.tanh %124 : vector<8x128xf32>
    %cst_31 = arith.constant 1.000000e+00 : f32
    %126 = vector.broadcast %cst_31 : f32 to vector<8x128xf32>
    %127 = arith.subf %126, %119 : vector<8x128xf32>
    %128 = arith.mulf %127, %125 : vector<8x128xf32>
    %129 = arith.mulf %119, %99 : vector<8x128xf32>
    %130 = arith.addf %128, %129 : vector<8x128xf32>
    %131 = arith.addi %8, %c2_i32 : i32
    %132 = vector.broadcast %131 : i32 to vector<8x1xi32>
    %133 = arith.cmpi slt, %132, %3 : vector<8x1xi32>
    %cst_32 = arith.constant 0.000000e+00 : f32
    %134 = vector.shape_cast %133 : vector<8x1xi1> to vector<8x1xi1>
    %135 = vector.broadcast %134 : vector<8x1xi1> to vector<8x128xi1>
    %136 = vector.broadcast %cst_32 : f32 to vector<8x128xf32>
    %137 = arith.select %135, %130, %136 : vector<8x128xi1>, vector<8x128xf32>
    %138 = arith.index_cast %c2_i32 : i32 to index
    %c0_33 = arith.constant 0 : index
    %c0_34 = arith.constant 0 : index
    %139 = vector.load %arg5[%138, %c0_33, %c0_34] : memref<8x8x128xf32, #tpu.memory_space<vmem>>, vector<1x8x128xf32>
    %140 = vector.shape_cast %139 : vector<1x8x128xf32> to vector<8x128xf32>
    %141 = vector.shape_cast %137 : vector<8x128xf32> to vector<1x8x128xf32>
    tpu.vector_store %arg5[%138, %c0_33, %c0_34], %141 {strides = array<i32>} : memref<8x8x128xf32, #tpu.memory_space<vmem>>, vector<1x8x128xf32>,
    %142 = vector.shape_cast %133 : vector<8x1xi1> to vector<8x1xi1>
    %143 = vector.broadcast %142 : vector<8x1xi1> to vector<8x128xi1>
    %144 = arith.select %143, %130, %99 : vector<8x128xi1>, vector<8x128xf32>
    %c3_i32 = arith.constant 3 : i32
    %145 = arith.index_cast %c3_i32 : i32 to index
    %c0_35 = arith.constant 0 : index
    %c0_36 = arith.constant 0 : index
    %146 = vector.load %arg2[%145, %c0_35, %c0_36] : memref<8x8x384xf32, #tpu.memory_space<vmem>>, vector<1x8x384xf32>
    %147 = vector.shape_cast %146 : vector<1x8x384xf32> to vector<8x384xf32>
    %cst_37 = arith.constant dense<0.000000e+00> : vector<8x384xf32>
    %148 = tpu.matmul %144, %4, %cst_37 {dimension_numbers = #tpu.dot_dimension_numbers<[1], [0], [0], [1], [0, 0, 1, 1], [], []>} : vector<8x128xf32>, vector<128x384xf32>, vector<8x384xf32> -> vector<8x384xf32>
    %149 = vector.extract_strided_slice %147 {offsets = [0, 0], sizes = [8, 128], strides = [1, 1]} : vector<8x384xf32> to vector<8x128xf32>
    %150 = vector.extract_strided_slice %148 {offsets = [0, 0], sizes = [8, 128], strides = [1, 1]} : vector<8x384xf32> to vector<8x128xf32>
    %151 = arith.addf %149, %150 : vector<8x128xf32>
    %152 = arith.negf %151 : vector<8x128xf32>
    %153 = math.exp %152 : vector<8x128xf32>
    %cst_38 = arith.constant 1.000000e+00 : f32
    %154 = vector.broadcast %cst_38 : f32 to vector<8x128xf32>
    %155 = arith.addf %154, %153 : vector<8x128xf32>
    %156 = arith.divf %154, %155 : vector<8x128xf32>
    %157 = vector.extract_strided_slice %147 {offsets = [0, 128], sizes = [8, 128], strides = [1, 1]} : vector<8x384xf32> to vector<8x128xf32>
    %158 = vector.extract_strided_slice %148 {offsets = [0, 128], sizes = [8, 128], strides = [1, 1]} : vector<8x384xf32> to vector<8x128xf32>
    %159 = arith.addf %157, %158 : vector<8x128xf32>
    %160 = arith.negf %159 : vector<8x128xf32>
    %161 = math.exp %160 : vector<8x128xf32>
    %cst_39 = arith.constant 1.000000e+00 : f32
    %162 = vector.broadcast %cst_39 : f32 to vector<8x128xf32>
    %163 = arith.addf %162, %161 : vector<8x128xf32>
    %164 = arith.divf %162, %163 : vector<8x128xf32>
    %165 = vector.extract_strided_slice %147 {offsets = [0, 256], sizes = [8, 128], strides = [1, 1]} : vector<8x384xf32> to vector<8x128xf32>
    %166 = vector.extract_strided_slice %148 {offsets = [0, 256], sizes = [8, 128], strides = [1, 1]} : vector<8x384xf32> to vector<8x128xf32>
    %167 = arith.addf %166, %7 : vector<8x128xf32>
    %168 = arith.mulf %156, %167 : vector<8x128xf32>
    %169 = arith.addf %165, %168 : vector<8x128xf32>
    %170 = math.tanh %169 : vector<8x128xf32>
    %cst_40 = arith.constant 1.000000e+00 : f32
    %171 = vector.broadcast %cst_40 : f32 to vector<8x128xf32>
    %172 = arith.subf %171, %164 : vector<8x128xf32>
    %173 = arith.mulf %172, %170 : vector<8x128xf32>
    %174 = arith.mulf %164, %144 : vector<8x128xf32>
    %175 = arith.addf %173, %174 : vector<8x128xf32>
    %176 = arith.addi %8, %c3_i32 : i32
    %177 = vector.broadcast %176 : i32 to vector<8x1xi32>
    %178 = arith.cmpi slt, %177, %3 : vector<8x1xi32>
    %cst_41 = arith.constant 0.000000e+00 : f32
    %179 = vector.shape_cast %178 : vector<8x1xi1> to vector<8x1xi1>
    %180 = vector.broadcast %179 : vector<8x1xi1> to vector<8x128xi1>
    %181 = vector.broadcast %cst_41 : f32 to vector<8x128xf32>
    %182 = arith.select %180, %175, %181 : vector<8x128xi1>, vector<8x128xf32>
    %183 = arith.index_cast %c3_i32 : i32 to index
    %c0_42 = arith.constant 0 : index
    %c0_43 = arith.constant 0 : index
    %184 = vector.load %arg5[%183, %c0_42, %c0_43] : memref<8x8x128xf32, #tpu.memory_space<vmem>>, vector<1x8x128xf32>
    %185 = vector.shape_cast %184 : vector<1x8x128xf32> to vector<8x128xf32>
    %186 = vector.shape_cast %182 : vector<8x128xf32> to vector<1x8x128xf32>
    tpu.vector_store %arg5[%183, %c0_42, %c0_43], %186 {strides = array<i32>} : memref<8x8x128xf32, #tpu.memory_space<vmem>>, vector<1x8x128xf32>,
    %187 = vector.shape_cast %178 : vector<8x1xi1> to vector<8x1xi1>
    %188 = vector.broadcast %187 : vector<8x1xi1> to vector<8x128xi1>
    %189 = arith.select %188, %175, %144 : vector<8x128xi1>, vector<8x128xf32>
    %c4_i32 = arith.constant 4 : i32
    %190 = arith.index_cast %c4_i32 : i32 to index
    %c0_44 = arith.constant 0 : index
    %c0_45 = arith.constant 0 : index
    %191 = vector.load %arg2[%190, %c0_44, %c0_45] : memref<8x8x384xf32, #tpu.memory_space<vmem>>, vector<1x8x384xf32>
    %192 = vector.shape_cast %191 : vector<1x8x384xf32> to vector<8x384xf32>
    %cst_46 = arith.constant dense<0.000000e+00> : vector<8x384xf32>
    %193 = tpu.matmul %189, %4, %cst_46 {dimension_numbers = #tpu.dot_dimension_numbers<[1], [0], [0], [1], [0, 0, 1, 1], [], []>} : vector<8x128xf32>, vector<128x384xf32>, vector<8x384xf32> -> vector<8x384xf32>
    %194 = vector.extract_strided_slice %192 {offsets = [0, 0], sizes = [8, 128], strides = [1, 1]} : vector<8x384xf32> to vector<8x128xf32>
    %195 = vector.extract_strided_slice %193 {offsets = [0, 0], sizes = [8, 128], strides = [1, 1]} : vector<8x384xf32> to vector<8x128xf32>
    %196 = arith.addf %194, %195 : vector<8x128xf32>
    %197 = arith.negf %196 : vector<8x128xf32>
    %198 = math.exp %197 : vector<8x128xf32>
    %cst_47 = arith.constant 1.000000e+00 : f32
    %199 = vector.broadcast %cst_47 : f32 to vector<8x128xf32>
    %200 = arith.addf %199, %198 : vector<8x128xf32>
    %201 = arith.divf %199, %200 : vector<8x128xf32>
    %202 = vector.extract_strided_slice %192 {offsets = [0, 128], sizes = [8, 128], strides = [1, 1]} : vector<8x384xf32> to vector<8x128xf32>
    %203 = vector.extract_strided_slice %193 {offsets = [0, 128], sizes = [8, 128], strides = [1, 1]} : vector<8x384xf32> to vector<8x128xf32>
    %204 = arith.addf %202, %203 : vector<8x128xf32>
    %205 = arith.negf %204 : vector<8x128xf32>
    %206 = math.exp %205 : vector<8x128xf32>
    %cst_48 = arith.constant 1.000000e+00 : f32
    %207 = vector.broadcast %cst_48 : f32 to vector<8x128xf32>
    %208 = arith.addf %207, %206 : vector<8x128xf32>
    %209 = arith.divf %207, %208 : vector<8x128xf32>
    %210 = vector.extract_strided_slice %192 {offsets = [0, 256], sizes = [8, 128], strides = [1, 1]} : vector<8x384xf32> to vector<8x128xf32>
    %211 = vector.extract_strided_slice %193 {offsets = [0, 256], sizes = [8, 128], strides = [1, 1]} : vector<8x384xf32> to vector<8x128xf32>
    %212 = arith.addf %211, %7 : vector<8x128xf32>
    %213 = arith.mulf %201, %212 : vector<8x128xf32>
    %214 = arith.addf %210, %213 : vector<8x128xf32>
    %215 = math.tanh %214 : vector<8x128xf32>
    %cst_49 = arith.constant 1.000000e+00 : f32
    %216 = vector.broadcast %cst_49 : f32 to vector<8x128xf32>
    %217 = arith.subf %216, %209 : vector<8x128xf32>
    %218 = arith.mulf %217, %215 : vector<8x128xf32>
    %219 = arith.mulf %209, %189 : vector<8x128xf32>
    %220 = arith.addf %218, %219 : vector<8x128xf32>
    %221 = arith.addi %8, %c4_i32 : i32
    %222 = vector.broadcast %221 : i32 to vector<8x1xi32>
    %223 = arith.cmpi slt, %222, %3 : vector<8x1xi32>
    %cst_50 = arith.constant 0.000000e+00 : f32
    %224 = vector.shape_cast %223 : vector<8x1xi1> to vector<8x1xi1>
    %225 = vector.broadcast %224 : vector<8x1xi1> to vector<8x128xi1>
    %226 = vector.broadcast %cst_50 : f32 to vector<8x128xf32>
    %227 = arith.select %225, %220, %226 : vector<8x128xi1>, vector<8x128xf32>
    %228 = arith.index_cast %c4_i32 : i32 to index
    %c0_51 = arith.constant 0 : index
    %c0_52 = arith.constant 0 : index
    %229 = vector.load %arg5[%228, %c0_51, %c0_52] : memref<8x8x128xf32, #tpu.memory_space<vmem>>, vector<1x8x128xf32>
    %230 = vector.shape_cast %229 : vector<1x8x128xf32> to vector<8x128xf32>
    %231 = vector.shape_cast %227 : vector<8x128xf32> to vector<1x8x128xf32>
    tpu.vector_store %arg5[%228, %c0_51, %c0_52], %231 {strides = array<i32>} : memref<8x8x128xf32, #tpu.memory_space<vmem>>, vector<1x8x128xf32>,
    %232 = vector.shape_cast %223 : vector<8x1xi1> to vector<8x1xi1>
    %233 = vector.broadcast %232 : vector<8x1xi1> to vector<8x128xi1>
    %234 = arith.select %233, %220, %189 : vector<8x128xi1>, vector<8x128xf32>
    %c5_i32 = arith.constant 5 : i32
    %235 = arith.index_cast %c5_i32 : i32 to index
    %c0_53 = arith.constant 0 : index
    %c0_54 = arith.constant 0 : index
    %236 = vector.load %arg2[%235, %c0_53, %c0_54] : memref<8x8x384xf32, #tpu.memory_space<vmem>>, vector<1x8x384xf32>
    %237 = vector.shape_cast %236 : vector<1x8x384xf32> to vector<8x384xf32>
    %cst_55 = arith.constant dense<0.000000e+00> : vector<8x384xf32>
    %238 = tpu.matmul %234, %4, %cst_55 {dimension_numbers = #tpu.dot_dimension_numbers<[1], [0], [0], [1], [0, 0, 1, 1], [], []>} : vector<8x128xf32>, vector<128x384xf32>, vector<8x384xf32> -> vector<8x384xf32>
    %239 = vector.extract_strided_slice %237 {offsets = [0, 0], sizes = [8, 128], strides = [1, 1]} : vector<8x384xf32> to vector<8x128xf32>
    %240 = vector.extract_strided_slice %238 {offsets = [0, 0], sizes = [8, 128], strides = [1, 1]} : vector<8x384xf32> to vector<8x128xf32>
    %241 = arith.addf %239, %240 : vector<8x128xf32>
    %242 = arith.negf %241 : vector<8x128xf32>
    %243 = math.exp %242 : vector<8x128xf32>
    %cst_56 = arith.constant 1.000000e+00 : f32
    %244 = vector.broadcast %cst_56 : f32 to vector<8x128xf32>
    %245 = arith.addf %244, %243 : vector<8x128xf32>
    %246 = arith.divf %244, %245 : vector<8x128xf32>
    %247 = vector.extract_strided_slice %237 {offsets = [0, 128], sizes = [8, 128], strides = [1, 1]} : vector<8x384xf32> to vector<8x128xf32>
    %248 = vector.extract_strided_slice %238 {offsets = [0, 128], sizes = [8, 128], strides = [1, 1]} : vector<8x384xf32> to vector<8x128xf32>
    %249 = arith.addf %247, %248 : vector<8x128xf32>
    %250 = arith.negf %249 : vector<8x128xf32>
    %251 = math.exp %250 : vector<8x128xf32>
    %cst_57 = arith.constant 1.000000e+00 : f32
    %252 = vector.broadcast %cst_57 : f32 to vector<8x128xf32>
    %253 = arith.addf %252, %251 : vector<8x128xf32>
    %254 = arith.divf %252, %253 : vector<8x128xf32>
    %255 = vector.extract_strided_slice %237 {offsets = [0, 256], sizes = [8, 128], strides = [1, 1]} : vector<8x384xf32> to vector<8x128xf32>
    %256 = vector.extract_strided_slice %238 {offsets = [0, 256], sizes = [8, 128], strides = [1, 1]} : vector<8x384xf32> to vector<8x128xf32>
    %257 = arith.addf %256, %7 : vector<8x128xf32>
    %258 = arith.mulf %246, %257 : vector<8x128xf32>
    %259 = arith.addf %255, %258 : vector<8x128xf32>
    %260 = math.tanh %259 : vector<8x128xf32>
    %cst_58 = arith.constant 1.000000e+00 : f32
    %261 = vector.broadcast %cst_58 : f32 to vector<8x128xf32>
    %262 = arith.subf %261, %254 : vector<8x128xf32>
    %263 = arith.mulf %262, %260 : vector<8x128xf32>
    %264 = arith.mulf %254, %234 : vector<8x128xf32>
    %265 = arith.addf %263, %264 : vector<8x128xf32>
    %266 = arith.addi %8, %c5_i32 : i32
    %267 = vector.broadcast %266 : i32 to vector<8x1xi32>
    %268 = arith.cmpi slt, %267, %3 : vector<8x1xi32>
    %cst_59 = arith.constant 0.000000e+00 : f32
    %269 = vector.shape_cast %268 : vector<8x1xi1> to vector<8x1xi1>
    %270 = vector.broadcast %269 : vector<8x1xi1> to vector<8x128xi1>
    %271 = vector.broadcast %cst_59 : f32 to vector<8x128xf32>
    %272 = arith.select %270, %265, %271 : vector<8x128xi1>, vector<8x128xf32>
    %273 = arith.index_cast %c5_i32 : i32 to index
    %c0_60 = arith.constant 0 : index
    %c0_61 = arith.constant 0 : index
    %274 = vector.load %arg5[%273, %c0_60, %c0_61] : memref<8x8x128xf32, #tpu.memory_space<vmem>>, vector<1x8x128xf32>
    %275 = vector.shape_cast %274 : vector<1x8x128xf32> to vector<8x128xf32>
    %276 = vector.shape_cast %272 : vector<8x128xf32> to vector<1x8x128xf32>
    tpu.vector_store %arg5[%273, %c0_60, %c0_61], %276 {strides = array<i32>} : memref<8x8x128xf32, #tpu.memory_space<vmem>>, vector<1x8x128xf32>,
    %277 = vector.shape_cast %268 : vector<8x1xi1> to vector<8x1xi1>
    %278 = vector.broadcast %277 : vector<8x1xi1> to vector<8x128xi1>
    %279 = arith.select %278, %265, %234 : vector<8x128xi1>, vector<8x128xf32>
    %c6_i32 = arith.constant 6 : i32
    %280 = arith.index_cast %c6_i32 : i32 to index
    %c0_62 = arith.constant 0 : index
    %c0_63 = arith.constant 0 : index
    %281 = vector.load %arg2[%280, %c0_62, %c0_63] : memref<8x8x384xf32, #tpu.memory_space<vmem>>, vector<1x8x384xf32>
    %282 = vector.shape_cast %281 : vector<1x8x384xf32> to vector<8x384xf32>
    %cst_64 = arith.constant dense<0.000000e+00> : vector<8x384xf32>
    %283 = tpu.matmul %279, %4, %cst_64 {dimension_numbers = #tpu.dot_dimension_numbers<[1], [0], [0], [1], [0, 0, 1, 1], [], []>} : vector<8x128xf32>, vector<128x384xf32>, vector<8x384xf32> -> vector<8x384xf32>
    %284 = vector.extract_strided_slice %282 {offsets = [0, 0], sizes = [8, 128], strides = [1, 1]} : vector<8x384xf32> to vector<8x128xf32>
    %285 = vector.extract_strided_slice %283 {offsets = [0, 0], sizes = [8, 128], strides = [1, 1]} : vector<8x384xf32> to vector<8x128xf32>
    %286 = arith.addf %284, %285 : vector<8x128xf32>
    %287 = arith.negf %286 : vector<8x128xf32>
    %288 = math.exp %287 : vector<8x128xf32>
    %cst_65 = arith.constant 1.000000e+00 : f32
    %289 = vector.broadcast %cst_65 : f32 to vector<8x128xf32>
    %290 = arith.addf %289, %288 : vector<8x128xf32>
    %291 = arith.divf %289, %290 : vector<8x128xf32>
    %292 = vector.extract_strided_slice %282 {offsets = [0, 128], sizes = [8, 128], strides = [1, 1]} : vector<8x384xf32> to vector<8x128xf32>
    %293 = vector.extract_strided_slice %283 {offsets = [0, 128], sizes = [8, 128], strides = [1, 1]} : vector<8x384xf32> to vector<8x128xf32>
    %294 = arith.addf %292, %293 : vector<8x128xf32>
    %295 = arith.negf %294 : vector<8x128xf32>
    %296 = math.exp %295 : vector<8x128xf32>
    %cst_66 = arith.constant 1.000000e+00 : f32
    %297 = vector.broadcast %cst_66 : f32 to vector<8x128xf32>
    %298 = arith.addf %297, %296 : vector<8x128xf32>
    %299 = arith.divf %297, %298 : vector<8x128xf32>
    %300 = vector.extract_strided_slice %282 {offsets = [0, 256], sizes = [8, 128], strides = [1, 1]} : vector<8x384xf32> to vector<8x128xf32>
    %301 = vector.extract_strided_slice %283 {offsets = [0, 256], sizes = [8, 128], strides = [1, 1]} : vector<8x384xf32> to vector<8x128xf32>
    %302 = arith.addf %301, %7 : vector<8x128xf32>
    %303 = arith.mulf %291, %302 : vector<8x128xf32>
    %304 = arith.addf %300, %303 : vector<8x128xf32>
    %305 = math.tanh %304 : vector<8x128xf32>
    %cst_67 = arith.constant 1.000000e+00 : f32
    %306 = vector.broadcast %cst_67 : f32 to vector<8x128xf32>
    %307 = arith.subf %306, %299 : vector<8x128xf32>
    %308 = arith.mulf %307, %305 : vector<8x128xf32>
    %309 = arith.mulf %299, %279 : vector<8x128xf32>
    %310 = arith.addf %308, %309 : vector<8x128xf32>
    %311 = arith.addi %8, %c6_i32 : i32
    %312 = vector.broadcast %311 : i32 to vector<8x1xi32>
    %313 = arith.cmpi slt, %312, %3 : vector<8x1xi32>
    %cst_68 = arith.constant 0.000000e+00 : f32
    %314 = vector.shape_cast %313 : vector<8x1xi1> to vector<8x1xi1>
    %315 = vector.broadcast %314 : vector<8x1xi1> to vector<8x128xi1>
    %316 = vector.broadcast %cst_68 : f32 to vector<8x128xf32>
    %317 = arith.select %315, %310, %316 : vector<8x128xi1>, vector<8x128xf32>
    %318 = arith.index_cast %c6_i32 : i32 to index
    %c0_69 = arith.constant 0 : index
    %c0_70 = arith.constant 0 : index
    %319 = vector.load %arg5[%318, %c0_69, %c0_70] : memref<8x8x128xf32, #tpu.memory_space<vmem>>, vector<1x8x128xf32>
    %320 = vector.shape_cast %319 : vector<1x8x128xf32> to vector<8x128xf32>
    %321 = vector.shape_cast %317 : vector<8x128xf32> to vector<1x8x128xf32>
    tpu.vector_store %arg5[%318, %c0_69, %c0_70], %321 {strides = array<i32>} : memref<8x8x128xf32, #tpu.memory_space<vmem>>, vector<1x8x128xf32>,
    %322 = vector.shape_cast %313 : vector<8x1xi1> to vector<8x1xi1>
    %323 = vector.broadcast %322 : vector<8x1xi1> to vector<8x128xi1>
    %324 = arith.select %323, %310, %279 : vector<8x128xi1>, vector<8x128xf32>
    %c7_i32 = arith.constant 7 : i32
    %325 = arith.index_cast %c7_i32 : i32 to index
    %c0_71 = arith.constant 0 : index
    %c0_72 = arith.constant 0 : index
    %326 = vector.load %arg2[%325, %c0_71, %c0_72] : memref<8x8x384xf32, #tpu.memory_space<vmem>>, vector<1x8x384xf32>
    %327 = vector.shape_cast %326 : vector<1x8x384xf32> to vector<8x384xf32>
    %cst_73 = arith.constant dense<0.000000e+00> : vector<8x384xf32>
    %328 = tpu.matmul %324, %4, %cst_73 {dimension_numbers = #tpu.dot_dimension_numbers<[1], [0], [0], [1], [0, 0, 1, 1], [], []>} : vector<8x128xf32>, vector<128x384xf32>, vector<8x384xf32> -> vector<8x384xf32>
    %329 = vector.extract_strided_slice %327 {offsets = [0, 0], sizes = [8, 128], strides = [1, 1]} : vector<8x384xf32> to vector<8x128xf32>
    %330 = vector.extract_strided_slice %328 {offsets = [0, 0], sizes = [8, 128], strides = [1, 1]} : vector<8x384xf32> to vector<8x128xf32>
    %331 = arith.addf %329, %330 : vector<8x128xf32>
    %332 = arith.negf %331 : vector<8x128xf32>
    %333 = math.exp %332 : vector<8x128xf32>
    %cst_74 = arith.constant 1.000000e+00 : f32
    %334 = vector.broadcast %cst_74 : f32 to vector<8x128xf32>
    %335 = arith.addf %334, %333 : vector<8x128xf32>
    %336 = arith.divf %334, %335 : vector<8x128xf32>
    %337 = vector.extract_strided_slice %327 {offsets = [0, 128], sizes = [8, 128], strides = [1, 1]} : vector<8x384xf32> to vector<8x128xf32>
    %338 = vector.extract_strided_slice %328 {offsets = [0, 128], sizes = [8, 128], strides = [1, 1]} : vector<8x384xf32> to vector<8x128xf32>
    %339 = arith.addf %337, %338 : vector<8x128xf32>
    %340 = arith.negf %339 : vector<8x128xf32>
    %341 = math.exp %340 : vector<8x128xf32>
    %cst_75 = arith.constant 1.000000e+00 : f32
    %342 = vector.broadcast %cst_75 : f32 to vector<8x128xf32>
    %343 = arith.addf %342, %341 : vector<8x128xf32>
    %344 = arith.divf %342, %343 : vector<8x128xf32>
    %345 = vector.extract_strided_slice %327 {offsets = [0, 256], sizes = [8, 128], strides = [1, 1]} : vector<8x384xf32> to vector<8x128xf32>
    %346 = vector.extract_strided_slice %328 {offsets = [0, 256], sizes = [8, 128], strides = [1, 1]} : vector<8x384xf32> to vector<8x128xf32>
    %347 = arith.addf %346, %7 : vector<8x128xf32>
    %348 = arith.mulf %336, %347 : vector<8x128xf32>
    %349 = arith.addf %345, %348 : vector<8x128xf32>
    %350 = math.tanh %349 : vector<8x128xf32>
    %cst_76 = arith.constant 1.000000e+00 : f32
    %351 = vector.broadcast %cst_76 : f32 to vector<8x128xf32>
    %352 = arith.subf %351, %344 : vector<8x128xf32>
    %353 = arith.mulf %352, %350 : vector<8x128xf32>
    %354 = arith.mulf %344, %324 : vector<8x128xf32>
    %355 = arith.addf %353, %354 : vector<8x128xf32>
    %356 = arith.addi %8, %c7_i32 : i32
    %357 = vector.broadcast %356 : i32 to vector<8x1xi32>
    %358 = arith.cmpi slt, %357, %3 : vector<8x1xi32>
    %cst_77 = arith.constant 0.000000e+00 : f32
    %359 = vector.shape_cast %358 : vector<8x1xi1> to vector<8x1xi1>
    %360 = vector.broadcast %359 : vector<8x1xi1> to vector<8x128xi1>
    %361 = vector.broadcast %cst_77 : f32 to vector<8x128xf32>
    %362 = arith.select %360, %355, %361 : vector<8x128xi1>, vector<8x128xf32>
    %363 = arith.index_cast %c7_i32 : i32 to index
    %c0_78 = arith.constant 0 : index
    %c0_79 = arith.constant 0 : index
    %364 = vector.load %arg5[%363, %c0_78, %c0_79] : memref<8x8x128xf32, #tpu.memory_space<vmem>>, vector<1x8x128xf32>
    %365 = vector.shape_cast %364 : vector<1x8x128xf32> to vector<8x128xf32>
    %366 = vector.shape_cast %362 : vector<8x128xf32> to vector<1x8x128xf32>
    tpu.vector_store %arg5[%363, %c0_78, %c0_79], %366 {strides = array<i32>} : memref<8x8x128xf32, #tpu.memory_space<vmem>>, vector<1x8x128xf32>,
    %367 = vector.shape_cast %358 : vector<8x1xi1> to vector<8x1xi1>
    %368 = vector.broadcast %367 : vector<8x1xi1> to vector<8x128xi1>
    %369 = arith.select %368, %355, %324 : vector<8x128xi1>, vector<8x128xf32>
    %c8_i32_80 = arith.constant 8 : i32
    %c0_81 = arith.constant 0 : index
    %c0_82 = arith.constant 0 : index
    %370 = vector.load %arg7[%c0_81, %c0_82] : memref<8x128xf32, #tpu.memory_space<vmem>>, vector<8x128xf32>
    tpu.vector_store %arg7[%c0_81, %c0_82], %369 {strides = array<i32>} : memref<8x128xf32, #tpu.memory_space<vmem>>, vector<8x128xf32>,
    %c0_i32_83 = arith.constant 0 : i32
    %371 = arith.cmpi eq, %arg0, %c0_i32_83 : i32
    %372 = arith.extui %371 : i1 to i32
    %c0_i32_84 = arith.constant 0 : i32
    %373 = arith.cmpi ne, %372, %c0_i32_84 : i32
    scf.if %373 {
      %c0_85 = arith.constant 0 : index
      %c0_86 = arith.constant 0 : index
      %c0_87 = arith.constant 0 : index
      %374 = vector.load %arg6[%c0_85, %c0_86, %c0_87] : memref<1x8x128xf32, #tpu.memory_space<vmem>>, vector<1x8x128xf32>
      %375 = vector.shape_cast %374 : vector<1x8x128xf32> to vector<8x128xf32>
      %376 = vector.shape_cast %369 : vector<8x128xf32> to vector<1x8x128xf32>
      tpu.vector_store %arg6[%c0_85, %c0_86, %c0_87], %376 {strides = array<i32>} : memref<1x8x128xf32, #tpu.memory_space<vmem>>, vector<1x8x128xf32>,
    } else {
    }
    return
  }
  func.func @transform_0(%arg0: i32) -> (i32, i32) {
    %c0_i32 = arith.constant 0 : i32
    %c0_i32_0 = arith.constant 0 : i32
    %c0_i32_1 = arith.constant 0 : i32
    return %c0_i32, %c0_i32_0 : i32, i32
  }
  func.func @transform_1(%arg0: i32) -> (i32, i32, i32) {
    %c0_i32 = arith.constant 0 : i32
    %c0_i32_0 = arith.constant 0 : i32
    %c0_i32_1 = arith.constant 0 : i32
    return %arg0, %c0_i32, %c0_i32_0 : i32, i32, i32
  }
  func.func @transform_2(%arg0: i32) -> (i32, i32) {
    %c0_i32 = arith.constant 0 : i32
    %c0_i32_0 = arith.constant 0 : i32
    %c0_i32_1 = arith.constant 0 : i32
    return %c0_i32, %c0_i32_0 : i32, i32
  }
  func.func @transform_3(%arg0: i32) -> (i32, i32) {
    %c0_i32 = arith.constant 0 : i32
    %c0_i32_0 = arith.constant 0 : i32
    %c0_i32_1 = arith.constant 0 : i32
    return %c0_i32, %c0_i32_0 : i32, i32
  }
  func.func @transform_4(%arg0: i32) -> (i32, i32, i32) {
    %c0_i32 = arith.constant 0 : i32
    %c0_i32_0 = arith.constant 0 : i32
    %c0_i32_1 = arith.constant 0 : i32
    return %arg0, %c0_i32, %c0_i32_0 : i32, i32, i32
  }
  func.func @transform_5(%arg0: i32) -> (i32, i32, i32) {
    %c0_i32 = arith.constant 0 : i32
    %c0_i32_0 = arith.constant 0 : i32
    %c0_i32_1 = arith.constant 0 : i32
    %c0_i32_2 = arith.constant 0 : i32
    return %c0_i32, %c0_i32_0, %c0_i32_1 : i32, i32, i32
  }
}

</mosaic_0001>

<llo_original>
// kernel: tpu_custom_call.1
$region0: #{tpu_custom_call.1}
  #allocation0 [shape = 'u32[]', space=smem, size = 0x4, offset = 0x4, fixed_abs, tag = 'smem constant byte address 0x4 - core index']
  #allocation1 [shape = 'u32[144,128]{1,0:T(1,128)}', space=vmem, size = 0x12000, scoped, tag = 'internal scratch']
  #allocation2 [shape = 'f32[8,128]{1,0:T(8,128)}', space=vmem, size = 0x1000, scoped, tag = 'scratch operand']
  %s0 = inlined_call_operand.vmem [shape: s32[8,1], index: 0, kind: input, shape index: {}]
  %s1 = inlined_call_operand.hbm [shape: f32[8,8,384], index: 1, kind: input, shape index: {}]
  %s2 = inlined_call_operand.hbm [shape: f32[128,384], index: 2, kind: input, shape index: {}]
  %s3 = inlined_call_operand.vmem [shape: f32[1,128], index: 3, kind: input, shape index: {}]
  %s4 = inlined_call_operand.hbm [shape: f32[8,8,128], index: 4, kind: output, shape index: {0}]
  %s5 = inlined_call_operand.hbm [shape: f32[1,8,128], index: 5, kind: output, shape index: {1}]
  %6 = xla_tuple %s4, %s5
  %s7 = sld [smem:[#allocation0]]
  $region50: #{tpu_custom_call.1} parent=0
    _
  %s9 = ssub.s32 1, %s7
  %s10 = scalar_select 0, %s9, %s7
  $region1: #{tpu_custom_call.1} parent=0
    #allocation3 [shape = 'u8[98304]{0}', space=vmem, size = 0x18000, scoped, tag = 'input window, operand 1, single buffered']
    #allocation4 [shape = 's32[1]{0}', space=sflag, size = 0x4, scoped, tag = 'scoped memory for tpu_custom_call.1']
    #allocation5 [shape = 's32[1]{0}', space=sflag, size = 0x4, scoped, tag = 'scoped memory for tpu_custom_call.1']
    #allocation6 [shape = 'u8[196608]{0}', space=vmem, size = 0x30000, scoped, tag = 'input window, operand 2, single buffered']
    #allocation7 [shape = 's32[1]{0}', space=sflag, size = 0x4, scoped, tag = 'scoped memory for tpu_custom_call.1']
    #allocation8 [shape = 'u8[32768]{0}', space=vmem, size = 0x8000, scoped, tag = 'output window, operand 0, single buffered']
    #allocation9 [shape = 'u8[4096]{0}', space=vmem, size = 0x1000, scoped, tag = 'output window, operand 1, single buffered']
    #allocation10 [shape = 's32[1]{0}', space=sflag, size = 0x4, scoped, tag = 'scoped memory for tpu_custom_call.1']
    %11 = vsyncpa [#allocation4], 0
    %12 = vsyncpa [#allocation7], 0
    %13 = vsyncpa [#allocation5], 0
    %14 = vsyncpa [#allocation10], 0
    // Predicated region
    $region2: #{tpu_custom_call.1} parent=1 // pred_check
      _
    $region3: #{tpu_custom_call.1} parent=1 // pred_check_branch
      %16 = sbr.rel (0) target = $region5
    $region4: #{tpu_custom_call.1} parent=1 // pred_region
      _
    $region5: #{tpu_custom_call.1} parent=1 // pred_fallthru
      _
    // Predicated region
    $region6: #{tpu_custom_call.1} parent=1 // pred_check
      _
    $region7: #{tpu_custom_call.1} parent=1 // pred_check_branch
      %18 = sbr.rel (0) target = $region9
    $region8: #{tpu_custom_call.1} parent=1 // pred_region
      %s20 = ssub.s32 3072, 3072
      %21 = vsyncadd [#allocation4], %s20
      %s22 = sshll.u32 [#allocation3], 4
      %s23 = int_to_ptr.vmem [resolvable:$true] %s22
      %28 = dma.hbm_to_vmem [thread:$0]  %s1, 3072, %s23, [#allocation4], 384, 384, 24
    $region9: #{tpu_custom_call.1} parent=1 // pred_fallthru
      _
    // Predicated region
    $region10: #{tpu_custom_call.1} parent=1 // pred_check
      _
    $region11: #{tpu_custom_call.1} parent=1 // pred_check_branch
      %30 = sbr.rel (0) target = $region13
    $region12: #{tpu_custom_call.1} parent=1 // pred_region
      %s32 = ssub.s32 6144, 6144
      %33 = vsyncadd [#allocation7], %s32
      %s34 = sshll.u32 [#allocation6], 4
      %s35 = int_to_ptr.vmem [resolvable:$true] %s34
      %40 = dma.hbm_to_vmem [thread:$0]  %s2, 6144, %s35, [#allocation7], 384, 384, 24
    $region13: #{tpu_custom_call.1} parent=1 // pred_fallthru
      _
    // Predicated region
    $region14: #{tpu_custom_call.1} parent=1 // pred_check
      _
    $region15: #{tpu_custom_call.1} parent=1 // pred_check_branch
      %42 = sbr.rel (0) target = $region17
    $region16: #{tpu_custom_call.1} parent=1 // pred_region
      _
    $region17: #{tpu_custom_call.1} parent=1 // pred_fallthru
      _
    // Predicated region
    $region18: #{tpu_custom_call.1} parent=1 // pred_check
      _
    $region19: #{tpu_custom_call.1} parent=1 // pred_check_branch
      %44 = sbr.rel (0) target = $region21
    $region20: #{tpu_custom_call.1} parent=1 // pred_region
      %45 = dma.done [#allocation4], 3072
    $region21: #{tpu_custom_call.1} parent=1 // pred_fallthru
      _
    // Predicated region
    $region22: #{tpu_custom_call.1} parent=1 // pred_check
      _
    $region23: #{tpu_custom_call.1} parent=1 // pred_check_branch
      %47 = sbr.rel (0) target = $region25
    $region24: #{tpu_custom_call.1} parent=1 // pred_region
      %48 = dma.done [#allocation7], 6144
    $region25: #{tpu_custom_call.1} parent=1 // pred_fallthru
      _
    %p49 = scmp.eq.s32.totalorder 0, 0
    // Predicated region
    $region26: #{tpu_custom_call.1} parent=1 // pred_check
      %p50 = pneg %p49
    $region27: #{tpu_custom_call.1} parent=1 // pred_check_branch
      %52 = sbr.rel (%p50) target = $region29
    $region28: #{tpu_custom_call.1} parent=1 // pred_region
      %53 = vst [vmem:[#allocation2] sm:$0xff] 0.0
    $region29: #{tpu_custom_call.1} parent=1 // pred_fallthru
      _
    %v54 = vld [vmem:[%s0] sm:$0xff]
    %v55 = vld [vmem:[#allocation6] sm:$0xff]
    %v56 = vld [vmem:[#allocation6 + $0x8] sm:$0xff]
    %v57 = vld [vmem:[#allocation6 + $0x10] sm:$0xff]
    %v58 = vld [vmem:[#allocation6 + $0x18] sm:$0xff]
    %v59 = vld [vmem:[#allocation6 + $0x20] sm:$0xff]
    %v60 = vld [vmem:[#allocation6 + $0x28] sm:$0xff]
    %v61 = vld [vmem:[#allocation6 + $0x30] sm:$0xff]
    %v62 = vld [vmem:[#allocation6 + $0x38] sm:$0xff]
    %v63 = vld [vmem:[#allocation6 + $0x40] sm:$0xff]
    %v64 = vld [vmem:[#allocation6 + $0x48] sm:$0xff]
    %v65 = vld [vmem:[#allocation6 + $0x50] sm:$0xff]
    %v66 = vld [vmem:[#allocation6 + $0x58] sm:$0xff]
    %v67 = vld [vmem:[#allocation6 + $0x60] sm:$0xff]
    %v68 = vld [vmem:[#allocation6 + $0x68] sm:$0xff]
    %v69 = vld [vmem:[#allocation6 + $0x70] sm:$0xff]
    %v70 = vld [vmem:[#allocation6 + $0x78] sm:$0xff]
    %v71 = vld [vmem:[#allocation6 + $0x80] sm:$0xff]
    %v72 = vld [vmem:[#allocation6 + $0x88] sm:$0xff]
    %v73 = vld [vmem:[#allocation6 + $0x90] sm:$0xff]
    %v74 = vld [vmem:[#allocation6 + $0x98] sm:$0xff]
    %v75 = vld [vmem:[#allocation6 + $0xa0] sm:$0xff]
    %v76 = vld [vmem:[#allocation6 + $0xa8] sm:$0xff]
    %v77 = vld [vmem:[#allocation6 + $0xb0] sm:$0xff]
    %v78 = vld [vmem:[#allocation6 + $0xb8] sm:$0xff]
    %v79 = vld [vmem:[#allocation6 + $0xc0] sm:$0xff]
    %v80 = vld [vmem:[#allocation6 + $0xc8] sm:$0xff]
    %v81 = vld [vmem:[#allocation6 + $0xd0] sm:$0xff]
    %v82 = vld [vmem:[#allocation6 + $0xd8] sm:$0xff]
    %v83 = vld [vmem:[#allocation6 + $0xe0] sm:$0xff]
    %v84 = vld [vmem:[#allocation6 + $0xe8] sm:$0xff]
    %v85 = vld [vmem:[#allocation6 + $0xf0] sm:$0xff]
    %v86 = vld [vmem:[#allocation6 + $0xf8] sm:$0xff]
    %v87 = vld [vmem:[#allocation6 + $0x100] sm:$0xff]
    %v88 = vld [vmem:[#allocation6 + $0x108] sm:$0xff]
    %v89 = vld [vmem:[#allocation6 + $0x110] sm:$0xff]
    %v90 = vld [vmem:[#allocation6 + $0x118] sm:$0xff]
    %v91 = vld [vmem:[#allocation6 + $0x120] sm:$0xff]
    %v92 = vld [vmem:[#allocation6 + $0x128] sm:$0xff]
    %v93 = vld [vmem:[#allocation6 + $0x130] sm:$0xff]
    %v94 = vld [vmem:[#allocation6 + $0x138] sm:$0xff]
    %v95 = vld [vmem:[#allocation6 + $0x140] sm:$0xff]
    %v96 = vld [vmem:[#allocation6 + $0x148] sm:$0xff]
    %v97 = vld [vmem:[#allocation6 + $0x150] sm:$0xff]
    %v98 = vld [vmem:[#allocation6 + $0x158] sm:$0xff]
    %v99 = vld [vmem:[#allocation6 + $0x160] sm:$0xff]
    %v100 = vld [vmem:[#allocation6 + $0x168] sm:$0xff]
    %v101 = vld [vmem:[#allocation6 + $0x170] sm:$0xff]
    %v102 = vld [vmem:[#allocation6 + $0x178] sm:$0xff]
    %v103 = vld [vmem:[%s3] sm:$0x1]
    %v105 = vlaneseq
    %v106 = vshrl.u32 %v105, 7
    %v107 = vsub.s32 0, %v106
    %v108 = vrot.slane %v103, %v107
    %s110 = smul.u32 0, 8
    %v111 = vld [vmem:[#allocation2] sm:$0xff]
    %v112 = vld [vmem:[#allocation3] sm:$0xff]
    %v113 = vld [vmem:[#allocation3 + $0x8] sm:$0xff]
    %v114 = vld [vmem:[#allocation3 + $0x10] sm:$0xff]
    %115 = vmatprep.subr.mxu0 %v101
    %116 = vmatpush1.msra.mxu0 %v100
    %117 = vmatprep.subr.mxu0 %v98
    %118 = vmatpush1.msra.mxu0 %v97
    %119 = vmatprep.subr.mxu0 %v95
    %120 = vmatpush1.msra.mxu0 %v94
    %121 = vmatprep.subr.mxu0 %v92
    %122 = vmatpush1.msra.mxu0 %v91
    %123 = vmatprep.subr.mxu0 %v89
    %124 = vmatpush1.msra.mxu0 %v88
    %125 = vmatprep.subr.mxu0 %v86
    %126 = vmatpush1.msra.mxu0 %v85
    %127 = vmatprep.subr.mxu0 %v83
    %128 = vmatpush1.msra.mxu0 %v82
    %129 = vmatprep.subr.mxu0 %v80
    %130 = vmatpush1.msra.mxu0 %v79
    %131 = vmatprep.subr.mxu0 %v77
    %132 = vmatpush1.msra.mxu0 %v76
    %133 = vmatprep.subr.mxu0 %v74
    %134 = vmatpush1.msra.mxu0 %v73
    %135 = vmatprep.subr.mxu0 %v71
    %136 = vmatpush1.msra.mxu0 %v70
    %137 = vmatprep.subr.mxu0 %v68
    %138 = vmatpush1.msra.mxu0 %v67
    %139 = vmatprep.subr.mxu0 %v65
    %140 = vmatpush1.msra.mxu0 %v64
    %141 = vmatprep.subr.mxu0 %v62
    %142 = vmatpush1.msra.mxu0 %v61
    %143 = vmatprep.subr.mxu0 %v59
    %144 = vmatpush1.msra.mxu0 %v58
    %145 = vmatprep.subr.mxu0 %v56
    %146 = vmatpush1.msra.mxu0 %v55
    %147 = vmatprep.subr.mxu0 0.0
    %148 = vmatpush2.msra.mxu0 0.0
    %149 = vmatprep.subr.mxu0 0.0
    %150 = vmatpush2.msra.mxu0 0.0
    %151 = vmatprep.subr.mxu0 0.0
    %152 = vmatpush2.msra.mxu0 0.0
    %153 = vmatprep.subr.mxu0 0.0
    %154 = vmatpush2.msra.mxu0 0.0
    %155 = vmatprep.subr.mxu0 0.0
    %156 = vmatpush2.msra.mxu0 0.0
    %157 = vmatprep.subr.mxu0 0.0
    %158 = vmatpush2.msra.mxu0 0.0
    %159 = vmatprep.subr.mxu0 0.0
    %160 = vmatpush2.msra.mxu0 0.0
    %161 = vmatprep.subr.mxu0 0.0
    %162 = vmatpush2.msra.mxu0 0.0
    %163 = vmatprep.subr.mxu0 0.0
    %164 = vmatpush2.msra.mxu0 0.0
    %165 = vmatprep.subr.mxu0 0.0
    %166 = vmatpush2.msra.mxu0 0.0
    %167 = vmatprep.subr.mxu0 0.0
    %168 = vmatpush2.msra.mxu0 0.0
    %169 = vmatprep.subr.mxu0 0.0
    %170 = vmatpush2.msra.mxu0 0.0
    %171 = vmatprep.subr.mxu0 0.0
    %172 = vmatpush2.msra.mxu0 0.0
    %173 = vmatprep.subr.mxu0 0.0
    %174 = vmatpush2.msra.mxu0 0.0
    %175 = vmatprep.subr.mxu0 0.0
    %176 = vmatpush2.msra.mxu0 0.0
    %177 = vmatprep.subr.mxu0 0.0
    %178 = vmatpush2.msra.mxu0 0.0
    %179 = vmatprep.mubr.f32.mxu0 0.0
    %180 = vmatmul.mubr.f32.gmra.mxu0 %v111
    %v181 = vpop.f32.mrf.mxu0
    %v182 = vadd.f32 0.0, %v181
    %v183 = vpop.f32.mrf.mxu0
    %v184 = vadd.f32 0.0, %v183
    %185 = vdwg.mxu0
    %186 = vmatprep.subr.mxu0 0.0
    %187 = vmatpush1.msra.mxu0 %v102
    %188 = vmatprep.subr.mxu0 0.0
    %189 = vmatpush1.msra.mxu0 %v99
    %190 = vmatprep.subr.mxu0 0.0
    %191 = vmatpush1.msra.mxu0 %v96
    %192 = vmatprep.subr.mxu0 0.0
    %193 = vmatpush1.msra.mxu0 %v93
    %194 = vmatprep.subr.mxu0 0.0
    %195 = vmatpush1.msra.mxu0 %v90
    %196 = vmatprep.subr.mxu0 0.0
    %197 = vmatpush1.msra.mxu0 %v87
    %198 = vmatprep.subr.mxu0 0.0
    %199 = vmatpush1.msra.mxu0 %v84
    %200 = vmatprep.subr.mxu0 0.0
    %201 = vmatpush1.msra.mxu0 %v81
    %202 = vmatprep.subr.mxu0 0.0
    %203 = vmatpush1.msra.mxu0 %v78
    %204 = vmatprep.subr.mxu0 0.0
    %205 = vmatpush1.msra.mxu0 %v75
    %206 = vmatprep.subr.mxu0 0.0
    %207 = vmatpush1.msra.mxu0 %v72
    %208 = vmatprep.subr.mxu0 0.0
    %209 = vmatpush1.msra.mxu0 %v69
    %210 = vmatprep.subr.mxu0 0.0
    %211 = vmatpush1.msra.mxu0 %v66
    %212 = vmatprep.subr.mxu0 0.0
    %213 = vmatpush1.msra.mxu0 %v63
    %214 = vmatprep.subr.mxu0 0.0
    %215 = vmatpush1.msra.mxu0 %v60
    %216 = vmatprep.subr.mxu0 0.0
    %217 = vmatpush1.msra.mxu0 %v57
    %218 = vmatprep.subr.mxu0 0.0
    %219 = vmatpush2.msra.mxu0 0.0
    %220 = vmatprep.subr.mxu0 0.0
    %221 = vmatpush2.msra.mxu0 0.0
    %222 = vmatprep.subr.mxu0 0.0
    %223 = vmatpush2.msra.mxu0 0.0
    %224 = vmatprep.subr.mxu0 0.0
    %225 = vmatpush2.msra.mxu0 0.0
    %226 = vmatprep.subr.mxu0 0.0
    %227 = vmatpush2.msra.mxu0 0.0
    %228 = vmatprep.subr.mxu0 0.0
    %229 = vmatpush2.msra.mxu0 0.0
    %230 = vmatprep.subr.mxu0 0.0
    %231 = vmatpush2.msra.mxu0 0.0
    %232 = vmatprep.subr.mxu0 0.0
    %233 = vmatpush2.msra.mxu0 0.0
    %234 = vmatprep.subr.mxu0 0.0
    %235 = vmatpush2.msra.mxu0 0.0
    %236 = vmatprep.subr.mxu0 0.0
    %237 = vmatpush2.msra.mxu0 0.0
    %238 = vmatprep.subr.mxu0 0.0
    %239 = vmatpush2.msra.mxu0 0.0
    %240 = vmatprep.subr.mxu0 0.0
    %241 = vmatpush2.msra.mxu0 0.0
    %242 = vmatprep.subr.mxu0 0.0
    %243 = vmatpush2.msra.mxu0 0.0
    %244 = vmatprep.subr.mxu0 0.0
    %245 = vmatpush2.msra.mxu0 0.0
    %246 = vmatprep.subr.mxu0 0.0
    %247 = vmatpush2.msra.mxu0 0.0
    %248 = vmatprep.subr.mxu0 0.0
    %249 = vmatpush2.msra.mxu0 0.0
    %250 = vmatprep.mubr.f32.mxu0 0.0
    %251 = vmatmul.mubr.f32.gmra.mxu0 %v111
    %v252 = vpop.f32.mrf.mxu0
    %v253 = vadd.f32 0.0, %v252
    %v254 = vpop.f32.mrf.mxu0
    %255 = vdwg.mxu0
    %v256 = vadd.f32 %v112, %v182
    %v257 = vxor.u32 %v256, 2147483648
    %v258 = vmul.f32 %v257, 1.442695
    %v259 = vpow.pop %v258
    %v260 = vadd.f32 %v259, 1.0
    %v261 = vrcp.pop %v260
    %v262 = vmul.f32 1.0, %v261
    %v263 = vadd.f32 %v113, %v184
    %v264 = vxor.u32 %v263, 2147483648
    %v265 = vmul.f32 %v264, 1.442695
    %v266 = vpow.pop %v265
    %v267 = vadd.f32 %v266, 1.0
    %v268 = vrcp.pop %v267
    %v269 = vmul.f32 1.0, %v268
    %v270 = vadd.f32 %v253, %v108
    %v271 = vmul.f32 %v262, %v270
    %v272 = vadd.f32 %v114, %v271
    %v273 = vtanh.pop %v272
    %v274 = vsub.f32 1.0, %v269
    %v275 = vmul.f32 %v274, %v273
    %v276 = vmul.f32 %v269, %v111
    %v277 = vadd.f32 %v275, %v276
    %v278 = vstv %s110
    %vm279 = vcmp.lt.s32.totalorder %v278, %v54
    %v280 = vsel %vm279, 1, 0
    %281 = vset.pattern.permute.xlu0 0
    %282 = vperm.xlu0 %281, %v280
    %v283 = vpop.permute.xlu0 %282
    %vm284 = vcmp.eq.s32.totalorder %v283, 1
    %v285 = vsel %vm284, %v277, 0.0
    %286 = vst [vmem:[#allocation8] sm:$0xff] %v285
    %v287 = vsel %vm284, %v277, %v111
    %s288 = scalar_lea.vmem [#allocation3], 24
    %v289 = vld [vmem:[%s288] sm:$0xff]
    %v290 = vld [vmem:[%s288 + $0x8] sm:$0xff]
    %v291 = vld [vmem:[%s288 + $0x10] sm:$0xff]
    %292 = vmatprep.subr.mxu0 %v101
    %293 = vmatpush1.msra.mxu0 %v100
    %294 = vmatprep.subr.mxu0 %v98
    %295 = vmatpush1.msra.mxu0 %v97
    %296 = vmatprep.subr.mxu0 %v95
    %297 = vmatpush1.msra.mxu0 %v94
    %298 = vmatprep.subr.mxu0 %v92
    %299 = vmatpush1.msra.mxu0 %v91
    %300 = vmatprep.subr.mxu0 %v89
    %301 = vmatpush1.msra.mxu0 %v88
    %302 = vmatprep.subr.mxu0 %v86
    %303 = vmatpush1.msra.mxu0 %v85
    %304 = vmatprep.subr.mxu0 %v83
    %305 = vmatpush1.msra.mxu0 %v82
    %306 = vmatprep.subr.mxu0 %v80
    %307 = vmatpush1.msra.mxu0 %v79
    %308 = vmatprep.subr.mxu0 %v77
    %309 = vmatpush1.msra.mxu0 %v76
    %310 = vmatprep.subr.mxu0 %v74
    %311 = vmatpush1.msra.mxu0 %v73
    %312 = vmatprep.subr.mxu0 %v71
    %313 = vmatpush1.msra.mxu0 %v70
    %314 = vmatprep.subr.mxu0 %v68
    %315 = vmatpush1.msra.mxu0 %v67
    %316 = vmatprep.subr.mxu0 %v65
    %317 = vmatpush1.msra.mxu0 %v64
    %318 = vmatprep.subr.mxu0 %v62
    %319 = vmatpush1.msra.mxu0 %v61
    %320 = vmatprep.subr.mxu0 %v59
    %321 = vmatpush1.msra.mxu0 %v58
    %322 = vmatprep.subr.mxu0 %v56
    %323 = vmatpush1.msra.mxu0 %v55
    %324 = vmatprep.subr.mxu0 0.0
    %325 = vmatpush2.msra.mxu0 0.0
    %326 = vmatprep.subr.mxu0 0.0
    %327 = vmatpush2.msra.mxu0 0.0
    %328 = vmatprep.subr.mxu0 0.0
    %329 = vmatpush2.msra.mxu0 0.0
    %330 = vmatprep.subr.mxu0 0.0
    %331 = vmatpush2.msra.mxu0 0.0
    %332 = vmatprep.subr.mxu0 0.0
    %333 = vmatpush2.msra.mxu0 0.0
    %334 = vmatprep.subr.mxu0 0.0
    %335 = vmatpush2.msra.mxu0 0.0
    %336 = vmatprep.subr.mxu0 0.0
    %337 = vmatpush2.msra.mxu0 0.0
    %338 = vmatprep.subr.mxu0 0.0
    %339 = vmatpush2.msra.mxu0 0.0
    %340 = vmatprep.subr.mxu0 0.0
    %341 = vmatpush2.msra.mxu0 0.0
    %342 = vmatprep.subr.mxu0 0.0
    %343 = vmatpush2.msra.mxu0 0.0
    %344 = vmatprep.subr.mxu0 0.0
    %345 = vmatpush2.msra.mxu0 0.0
    %346 = vmatprep.subr.mxu0 0.0
    %347 = vmatpush2.msra.mxu0 0.0
    %348 = vmatprep.subr.mxu0 0.0
    %349 = vmatpush2.msra.mxu0 0.0
    %350 = vmatprep.subr.mxu0 0.0
    %351 = vmatpush2.msra.mxu0 0.0
    %352 = vmatprep.subr.mxu0 0.0
    %353 = vmatpush2.msra.mxu0 0.0
    %354 = vmatprep.subr.mxu0 0.0
    %355 = vmatpush2.msra.mxu0 0.0
    %356 = vmatprep.mubr.f32.mxu0 0.0
    %357 = vmatmul.mubr.f32.gmra.mxu0 %v287
    %v358 = vpop.f32.mrf.mxu0
    %v359 = vadd.f32 0.0, %v358
    %v360 = vpop.f32.mrf.mxu0
    %v361 = vadd.f32 0.0, %v360
    %362 = vdwg.mxu0
    %363 = vmatprep.subr.mxu0 0.0
    %364 = vmatpush1.msra.mxu0 %v102
    %365 = vmatprep.subr.mxu0 0.0
    %366 = vmatpush1.msra.mxu0 %v99
    %367 = vmatprep.subr.mxu0 0.0
    %368 = vmatpush1.msra.mxu0 %v96
    %369 = vmatprep.subr.mxu0 0.0
    %370 = vmatpush1.msra.mxu0 %v93
    %371 = vmatprep.subr.mxu0 0.0
    %372 = vmatpush1.msra.mxu0 %v90
    %373 = vmatprep.subr.mxu0 0.0
    %374 = vmatpush1.msra.mxu0 %v87
    %375 = vmatprep.subr.mxu0 0.0
    %376 = vmatpush1.msra.mxu0 %v84
    %377 = vmatprep.subr.mxu0 0.0
    %378 = vmatpush1.msra.mxu0 %v81
    %379 = vmatprep.subr.mxu0 0.0
    %380 = vmatpush1.msra.mxu0 %v78
    %381 = vmatprep.subr.mxu0 0.0
    %382 = vmatpush1.msra.mxu0 %v75
    %383 = vmatprep.subr.mxu0 0.0
    %384 = vmatpush1.msra.mxu0 %v72
    %385 = vmatprep.subr.mxu0 0.0
    %386 = vmatpush1.msra.mxu0 %v69
    %387 = vmatprep.subr.mxu0 0.0
    %388 = vmatpush1.msra.mxu0 %v66
    %389 = vmatprep.subr.mxu0 0.0
    %390 = vmatpush1.msra.mxu0 %v63
    %391 = vmatprep.subr.mxu0 0.0
    %392 = vmatpush1.msra.mxu0 %v60
    %393 = vmatprep.subr.mxu0 0.0
    %394 = vmatpush1.msra.mxu0 %v57
    %395 = vmatprep.subr.mxu0 0.0
    %396 = vmatpush2.msra.mxu0 0.0
    %397 = vmatprep.subr.mxu0 0.0
    %398 = vmatpush2.msra.mxu0 0.0
    %399 = vmatprep.subr.mxu0 0.0
    %400 = vmatpush2.msra.mxu0 0.0
    %401 = vmatprep.subr.mxu0 0.0
    %402 = vmatpush2.msra.mxu0 0.0
    %403 = vmatprep.subr.mxu0 0.0
    %404 = vmatpush2.msra.mxu0 0.0
    %405 = vmatprep.subr.mxu0 0.0
    %406 = vmatpush2.msra.mxu0 0.0
    %407 = vmatprep.subr.mxu0 0.0
    %408 = vmatpush2.msra.mxu0 0.0
    %409 = vmatprep.subr.mxu0 0.0
    %410 = vmatpush2.msra.mxu0 0.0
    %411 = vmatprep.subr.mxu0 0.0
    %412 = vmatpush2.msra.mxu0 0.0
    %413 = vmatprep.subr.mxu0 0.0
    %414 = vmatpush2.msra.mxu0 0.0
    %415 = vmatprep.subr.mxu0 0.0
    %416 = vmatpush2.msra.mxu0 0.0
    %417 = vmatprep.subr.mxu0 0.0
    %418 = vmatpush2.msra.mxu0 0.0
    %419 = vmatprep.subr.mxu0 0.0
    %420 = vmatpush2.msra.mxu0 0.0
    %421 = vmatprep.subr.mxu0 0.0
    %422 = vmatpush2.msra.mxu0 0.0
    %423 = vmatprep.subr.mxu0 0.0
    %424 = vmatpush2.msra.mxu0 0.0
    %425 = vmatprep.subr.mxu0 0.0
    %426 = vmatpush2.msra.mxu0 0.0
    %427 = vmatprep.mubr.f32.mxu0 0.0
    %428 = vmatmul.mubr.f32.gmra.mxu0 %v287
    %v429 = vpop.f32.mrf.mxu0
    %v430 = vadd.f32 0.0, %v429
    %v431 = vpop.f32.mrf.mxu0
    %432 = vdwg.mxu0
    %v433 = vadd.f32 %v289, %v359
    %v434 = vxor.u32 %v433, 2147483648
    %v435 = vmul.f32 %v434, 1.442695
    %v436 = vpow.pop %v435
    %v437 = vadd.f32 %v436, 1.0
    %v438 = vrcp.pop %v437
    %v439 = vmul.f32 1.0, %v438
    %v440 = vadd.f32 %v290, %v361
    %v441 = vxor.u32 %v440, 2147483648
    %v442 = vmul.f32 %v441, 1.442695
    %v443 = vpow.pop %v442
    %v444 = vadd.f32 %v443, 1.0
    %v445 = vrcp.pop %v444
    %v446 = vmul.f32 1.0, %v445
    %v447 = vadd.f32 %v430, %v108
    %v448 = vmul.f32 %v439, %v447
    %v449 = vadd.f32 %v291, %v448
    %v450 = vtanh.pop %v449
    %v451 = vsub.f32 1.0, %v446
    %v452 = vmul.f32 %v451, %v450
    %v453 = vmul.f32 %v446, %v287
    %v454 = vadd.f32 %v452, %v453
    %s455 = sadd.s32 %s110, 1
    %v456 = vstv %s455
    %vm457 = vcmp.lt.s32.totalorder %v456, %v54
    %v458 = vsel %vm457, 1, 0
    %459 = vset.pattern.permute.xlu0 0
    %460 = vperm.xlu0 %459, %v458
    %v461 = vpop.permute.xlu0 %460
    %vm462 = vcmp.eq.s32.totalorder %v461, 1
    %v463 = vsel %vm462, %v454, 0.0
    %s464 = scalar_lea.vmem [#allocation8], 8
    %465 = vst [vmem:[%s464] sm:$0xff] %v463
    %v466 = vsel %vm462, %v454, %v287
    %s467 = scalar_lea.vmem [#allocation3], 48
    %v468 = vld [vmem:[%s467] sm:$0xff]
    %v469 = vld [vmem:[%s467 + $0x8] sm:$0xff]
    %v470 = vld [vmem:[%s467 + $0x10] sm:$0xff]
    %471 = vmatprep.subr.mxu0 %v101
    %472 = vmatpush1.msra.mxu0 %v100
    %473 = vmatprep.subr.mxu0 %v98
    %474 = vmatpush1.msra.mxu0 %v97
    %475 = vmatprep.subr.mxu0 %v95
    %476 = vmatpush1.msra.mxu0 %v94
    %477 = vmatprep.subr.mxu0 %v92
    %478 = vmatpush1.msra.mxu0 %v91
    %479 = vmatprep.subr.mxu0 %v89
    %480 = vmatpush1.msra.mxu0 %v88
    %481 = vmatprep.subr.mxu0 %v86
    %482 = vmatpush1.msra.mxu0 %v85
    %483 = vmatprep.subr.mxu0 %v83
    %484 = vmatpush1.msra.mxu0 %v82
    %485 = vmatprep.subr.mxu0 %v80
    %486 = vmatpush1.msra.mxu0 %v79
    %487 = vmatprep.subr.mxu0 %v77
    %488 = vmatpush1.msra.mxu0 %v76
    %489 = vmatprep.subr.mxu0 %v74
    %490 = vmatpush1.msra.mxu0 %v73
    %491 = vmatprep.subr.mxu0 %v71
    %492 = vmatpush1.msra.mxu0 %v70
    %493 = vmatprep.subr.mxu0 %v68
    %494 = vmatpush1.msra.mxu0 %v67
    %495 = vmatprep.subr.mxu0 %v65
    %496 = vmatpush1.msra.mxu0 %v64
    %497 = vmatprep.subr.mxu0 %v62
    %498 = vmatpush1.msra.mxu0 %v61
    %499 = vmatprep.subr.mxu0 %v59
    %500 = vmatpush1.msra.mxu0 %v58
    %501 = vmatprep.subr.mxu0 %v56
    %502 = vmatpush1.msra.mxu0 %v55
    %503 = vmatprep.subr.mxu0 0.0
    %504 = vmatpush2.msra.mxu0 0.0
    %505 = vmatprep.subr.mxu0 0.0
    %506 = vmatpush2.msra.mxu0 0.0
    %507 = vmatprep.subr.mxu0 0.0
    %508 = vmatpush2.msra.mxu0 0.0
    %509 = vmatprep.subr.mxu0 0.0
    %510 = vmatpush2.msra.mxu0 0.0
    %511 = vmatprep.subr.mxu0 0.0
    %512 = vmatpush2.msra.mxu0 0.0
    %513 = vmatprep.subr.mxu0 0.0
    %514 = vmatpush2.msra.mxu0 0.0
    %515 = vmatprep.subr.mxu0 0.0
    %516 = vmatpush2.msra.mxu0 0.0
    %517 = vmatprep.subr.mxu0 0.0
    %518 = vmatpush2.msra.mxu0 0.0
    %519 = vmatprep.subr.mxu0 0.0
    %520 = vmatpush2.msra.mxu0 0.0
    %521 = vmatprep.subr.mxu0 0.0
    %522 = vmatpush2.msra.mxu0 0.0
    %523 = vmatprep.subr.mxu0 0.0
    %524 = vmatpush2.msra.mxu0 0.0
    %525 = vmatprep.subr.mxu0 0.0
    %526 = vmatpush2.msra.mxu0 0.0
    %527 = vmatprep.subr.mxu0 0.0
    %528 = vmatpush2.msra.mxu0 0.0
    %529 = vmatprep.subr.mxu0 0.0
    %530 = vmatpush2.msra.mxu0 0.0
    %531 = vmatprep.subr.mxu0 0.0
    %532 = vmatpush2.msra.mxu0 0.0
    %533 = vmatprep.subr.mxu0 0.0
    %534 = vmatpush2.msra.mxu0 0.0
    %535 = vmatprep.mubr.f32.mxu0 0.0
    %536 = vmatmul.mubr.f32.gmra.mxu0 %v466
    %v537 = vpop.f32.mrf.mxu0
    %v538 = vadd.f32 0.0, %v537
    %v539 = vpop.f32.mrf.mxu0
    %v540 = vadd.f32 0.0, %v539
    %541 = vdwg.mxu0
    %542 = vmatprep.subr.mxu0 0.0
    %543 = vmatpush1.msra.mxu0 %v102
    %544 = vmatprep.subr.mxu0 0.0
    %545 = vmatpush1.msra.mxu0 %v99
    %546 = vmatprep.subr.mxu0 0.0
    %547 = vmatpush1.msra.mxu0 %v96
    %548 = vmatprep.subr.mxu0 0.0
    %549 = vmatpush1.msra.mxu0 %v93
    %550 = vmatprep.subr.mxu0 0.0
    %551 = vmatpush1.msra.mxu0 %v90
    %552 = vmatprep.subr.mxu0 0.0
    %553 = vmatpush1.msra.mxu0 %v87
    %554 = vmatprep.subr.mxu0 0.0
    %555 = vmatpush1.msra.mxu0 %v84
    %556 = vmatprep.subr.mxu0 0.0
    %557 = vmatpush1.msra.mxu0 %v81
    %558 = vmatprep.subr.mxu0 0.0
    %559 = vmatpush1.msra.mxu0 %v78
    %560 = vmatprep.subr.mxu0 0.0
    %561 = vmatpush1.msra.mxu0 %v75
    %562 = vmatprep.subr.mxu0 0.0
    %563 = vmatpush1.msra.mxu0 %v72
    %564 = vmatprep.subr.mxu0 0.0
    %565 = vmatpush1.msra.mxu0 %v69
    %566 = vmatprep.subr.mxu0 0.0
    %567 = vmatpush1.msra.mxu0 %v66
    %568 = vmatprep.subr.mxu0 0.0
    %569 = vmatpush1.msra.mxu0 %v63
    %570 = vmatprep.subr.mxu0 0.0
    %571 = vmatpush1.msra.mxu0 %v60
    %572 = vmatprep.subr.mxu0 0.0
    %573 = vmatpush1.msra.mxu0 %v57
    %574 = vmatprep.subr.mxu0 0.0
    %575 = vmatpush2.msra.mxu0 0.0
    %576 = vmatprep.subr.mxu0 0.0
    %577 = vmatpush2.msra.mxu0 0.0
    %578 = vmatprep.subr.mxu0 0.0
    %579 = vmatpush2.msra.mxu0 0.0
    %580 = vmatprep.subr.mxu0 0.0
    %581 = vmatpush2.msra.mxu0 0.0
    %582 = vmatprep.subr.mxu0 0.0
    %583 = vmatpush2.msra.mxu0 0.0
    %584 = vmatprep.subr.mxu0 0.0
    %585 = vmatpush2.msra.mxu0 0.0
    %586 = vmatprep.subr.mxu0 0.0
    %587 = vmatpush2.msra.mxu0 0.0
    %588 = vmatprep.subr.mxu0 0.0
    %589 = vmatpush2.msra.mxu0 0.0
    %590 = vmatprep.subr.mxu0 0.0
    %591 = vmatpush2.msra.mxu0 0.0
    %592 = vmatprep.subr.mxu0 0.0
    %593 = vmatpush2.msra.mxu0 0.0
    %594 = vmatprep.subr.mxu0 0.0
    %595 = vmatpush2.msra.mxu0 0.0
    %596 = vmatprep.subr.mxu0 0.0
    %597 = vmatpush2.msra.mxu0 0.0
    %598 = vmatprep.subr.mxu0 0.0
    %599 = vmatpush2.msra.mxu0 0.0
    %600 = vmatprep.subr.mxu0 0.0
    %601 = vmatpush2.msra.mxu0 0.0
    %602 = vmatprep.subr.mxu0 0.0
    %603 = vmatpush2.msra.mxu0 0.0
    %604 = vmatprep.subr.mxu0 0.0
    %605 = vmatpush2.msra.mxu0 0.0
    %606 = vmatprep.mubr.f32.mxu0 0.0
    %607 = vmatmul.mubr.f32.gmra.mxu0 %v466
    %v608 = vpop.f32.mrf.mxu0
    %v609 = vadd.f32 0.0, %v608
    %v610 = vpop.f32.mrf.mxu0
    %611 = vdwg.mxu0
    %v612 = vadd.f32 %v468, %v538
    %v613 = vxor.u32 %v612, 2147483648
    %v614 = vmul.f32 %v613, 1.442695
    %v615 = vpow.pop %v614
    %v616 = vadd.f32 %v615, 1.0
    %v617 = vrcp.pop %v616
    %v618 = vmul.f32 1.0, %v617
    %v619 = vadd.f32 %v469, %v540
    %v620 = vxor.u32 %v619, 2147483648
    %v621 = vmul.f32 %v620, 1.442695
    %v622 = vpow.pop %v621
    %v623 = vadd.f32 %v622, 1.0
    %v624 = vrcp.pop %v623
    %v625 = vmul.f32 1.0, %v624
    %v626 = vadd.f32 %v609, %v108
    %v627 = vmul.f32 %v618, %v626
    %v628 = vadd.f32 %v470, %v627
    %v629 = vtanh.pop %v628
    %v630 = vsub.f32 1.0, %v625
    %v631 = vmul.f32 %v630, %v629
    %v632 = vmul.f32 %v625, %v466
    %v633 = vadd.f32 %v631, %v632
    %s634 = sadd.s32 %s110, 2
    %v635 = vstv %s634
    %vm636 = vcmp.lt.s32.totalorder %v635, %v54
    %v637 = vsel %vm636, 1, 0
    %638 = vset.pattern.permute.xlu0 0
    %639 = vperm.xlu0 %638, %v637
    %v640 = vpop.permute.xlu0 %639
    %vm641 = vcmp.eq.s32.totalorder %v640, 1
    %v642 = vsel %vm641, %v633, 0.0
    %s643 = scalar_lea.vmem [#allocation8], 16
    %644 = vst [vmem:[%s643] sm:$0xff] %v642
    %v645 = vsel %vm641, %v633, %v466
    %s646 = scalar_lea.vmem [#allocation3], 72
    %v647 = vld [vmem:[%s646] sm:$0xff]
    %v648 = vld [vmem:[%s646 + $0x8] sm:$0xff]
    %v649 = vld [vmem:[%s646 + $0x10] sm:$0xff]
    %650 = vmatprep.subr.mxu0 %v101
    %651 = vmatpush1.msra.mxu0 %v100
    %652 = vmatprep.subr.mxu0 %v98
    %653 = vmatpush1.msra.mxu0 %v97
    %654 = vmatprep.subr.mxu0 %v95
    %655 = vmatpush1.msra.mxu0 %v94
    %656 = vmatprep.subr.mxu0 %v92
    %657 = vmatpush1.msra.mxu0 %v91
    %658 = vmatprep.subr.mxu0 %v89
    %659 = vmatpush1.msra.mxu0 %v88
    %660 = vmatprep.subr.mxu0 %v86
    %661 = vmatpush1.msra.mxu0 %v85
    %662 = vmatprep.subr.mxu0 %v83
    %663 = vmatpush1.msra.mxu0 %v82
    %664 = vmatprep.subr.mxu0 %v80
    %665 = vmatpush1.msra.mxu0 %v79
    %666 = vmatprep.subr.mxu0 %v77
    %667 = vmatpush1.msra.mxu0 %v76
    %668 = vmatprep.subr.mxu0 %v74
    %669 = vmatpush1.msra.mxu0 %v73
    %670 = vmatprep.subr.mxu0 %v71
    %671 = vmatpush1.msra.mxu0 %v70
    %672 = vmatprep.subr.mxu0 %v68
    %673 = vmatpush1.msra.mxu0 %v67
    %674 = vmatprep.subr.mxu0 %v65
    %675 = vmatpush1.msra.mxu0 %v64
    %676 = vmatprep.subr.mxu0 %v62
    %677 = vmatpush1.msra.mxu0 %v61
    %678 = vmatprep.subr.mxu0 %v59
    %679 = vmatpush1.msra.mxu0 %v58
    %680 = vmatprep.subr.mxu0 %v56
    %681 = vmatpush1.msra.mxu0 %v55
    %682 = vmatprep.subr.mxu0 0.0
    %683 = vmatpush2.msra.mxu0 0.0
    %684 = vmatprep.subr.mxu0 0.0
    %685 = vmatpush2.msra.mxu0 0.0
    %686 = vmatprep.subr.mxu0 0.0
    %687 = vmatpush2.msra.mxu0 0.0
    %688 = vmatprep.subr.mxu0 0.0
    %689 = vmatpush2.msra.mxu0 0.0
    %690 = vmatprep.subr.mxu0 0.0
    %691 = vmatpush2.msra.mxu0 0.0
    %692 = vmatprep.subr.mxu0 0.0
    %693 = vmatpush2.msra.mxu0 0.0
    %694 = vmatprep.subr.mxu0 0.0
    %695 = vmatpush2.msra.mxu0 0.0
    %696 = vmatprep.subr.mxu0 0.0
    %697 = vmatpush2.msra.mxu0 0.0
    %698 = vmatprep.subr.mxu0 0.0
    %699 = vmatpush2.msra.mxu0 0.0
    %700 = vmatprep.subr.mxu0 0.0
    %701 = vmatpush2.msra.mxu0 0.0
    %702 = vmatprep.subr.mxu0 0.0
    %703 = vmatpush2.msra.mxu0 0.0
    %704 = vmatprep.subr.mxu0 0.0
    %705 = vmatpush2.msra.mxu0 0.0
    %706 = vmatprep.subr.mxu0 0.0
    %707 = vmatpush2.msra.mxu0 0.0
    %708 = vmatprep.subr.mxu0 0.0
    %709 = vmatpush2.msra.mxu0 0.0
    %710 = vmatprep.subr.mxu0 0.0
    %711 = vmatpush2.msra.mxu0 0.0
    %712 = vmatprep.subr.mxu0 0.0
    %713 = vmatpush2.msra.mxu0 0.0
    %714 = vmatprep.mubr.f32.mxu0 0.0
    %715 = vmatmul.mubr.f32.gmra.mxu0 %v645
    %v716 = vpop.f32.mrf.mxu0
    %v717 = vadd.f32 0.0, %v716
    %v718 = vpop.f32.mrf.mxu0
    %v719 = vadd.f32 0.0, %v718
    %720 = vdwg.mxu0
    %721 = vmatprep.subr.mxu0 0.0
    %722 = vmatpush1.msra.mxu0 %v102
    %723 = vmatprep.subr.mxu0 0.0
    %724 = vmatpush1.msra.mxu0 %v99
    %725 = vmatprep.subr.mxu0 0.0
    %726 = vmatpush1.msra.mxu0 %v96
    %727 = vmatprep.subr.mxu0 0.0
    %728 = vmatpush1.msra.mxu0 %v93
    %729 = vmatprep.subr.mxu0 0.0
    %730 = vmatpush1.msra.mxu0 %v90
    %731 = vmatprep.subr.mxu0 0.0
    %732 = vmatpush1.msra.mxu0 %v87
    %733 = vmatprep.subr.mxu0 0.0
    %734 = vmatpush1.msra.mxu0 %v84
    %735 = vmatprep.subr.mxu0 0.0
    %736 = vmatpush1.msra.mxu0 %v81
    %737 = vmatprep.subr.mxu0 0.0
    %738 = vmatpush1.msra.mxu0 %v78
    %739 = vmatprep.subr.mxu0 0.0
    %740 = vmatpush1.msra.mxu0 %v75
    %741 = vmatprep.subr.mxu0 0.0
    %742 = vmatpush1.msra.mxu0 %v72
    %743 = vmatprep.subr.mxu0 0.0
    %744 = vmatpush1.msra.mxu0 %v69
    %745 = vmatprep.subr.mxu0 0.0
    %746 = vmatpush1.msra.mxu0 %v66
    %747 = vmatprep.subr.mxu0 0.0
    %748 = vmatpush1.msra.mxu0 %v63
    %749 = vmatprep.subr.mxu0 0.0
    %750 = vmatpush1.msra.mxu0 %v60
    %751 = vmatprep.subr.mxu0 0.0
    %752 = vmatpush1.msra.mxu0 %v57
    %753 = vmatprep.subr.mxu0 0.0
    %754 = vmatpush2.msra.mxu0 0.0
    %755 = vmatprep.subr.mxu0 0.0
    %756 = vmatpush2.msra.mxu0 0.0
    %757 = vmatprep.subr.mxu0 0.0
    %758 = vmatpush2.msra.mxu0 0.0
    %759 = vmatprep.subr.mxu0 0.0
    %760 = vmatpush2.msra.mxu0 0.0
    %761 = vmatprep.subr.mxu0 0.0
    %762 = vmatpush2.msra.mxu0 0.0
    %763 = vmatprep.subr.mxu0 0.0
    %764 = vmatpush2.msra.mxu0 0.0
    %765 = vmatprep.subr.mxu0 0.0
    %766 = vmatpush2.msra.mxu0 0.0
    %767 = vmatprep.subr.mxu0 0.0
    %768 = vmatpush2.msra.mxu0 0.0
    %769 = vmatprep.subr.mxu0 0.0
    %770 = vmatpush2.msra.mxu0 0.0
    %771 = vmatprep.subr.mxu0 0.0
    %772 = vmatpush2.msra.mxu0 0.0
    %773 = vmatprep.subr.mxu0 0.0
    %774 = vmatpush2.msra.mxu0 0.0
    %775 = vmatprep.subr.mxu0 0.0
    %776 = vmatpush2.msra.mxu0 0.0
    %777 = vmatprep.subr.mxu0 0.0
    %778 = vmatpush2.msra.mxu0 0.0
    %779 = vmatprep.subr.mxu0 0.0
    %780 = vmatpush2.msra.mxu0 0.0
    %781 = vmatprep.subr.mxu0 0.0
    %782 = vmatpush2.msra.mxu0 0.0
    %783 = vmatprep.subr.mxu0 0.0
    %784 = vmatpush2.msra.mxu0 0.0
    %785 = vmatprep.mubr.f32.mxu0 0.0
    %786 = vmatmul.mubr.f32.gmra.mxu0 %v645
    %v787 = vpop.f32.mrf.mxu0
    %v788 = vadd.f32 0.0, %v787
    %v789 = vpop.f32.mrf.mxu0
    %790 = vdwg.mxu0
    %v791 = vadd.f32 %v647, %v717
    %v792 = vxor.u32 %v791, 2147483648
    %v793 = vmul.f32 %v792, 1.442695
    %v794 = vpow.pop %v793
    %v795 = vadd.f32 %v794, 1.0
    %v796 = vrcp.pop %v795
    %v797 = vmul.f32 1.0, %v796
    %v798 = vadd.f32 %v648, %v719
    %v799 = vxor.u32 %v798, 2147483648
    %v800 = vmul.f32 %v799, 1.442695
    %v801 = vpow.pop %v800
    %v802 = vadd.f32 %v801, 1.0
    %v803 = vrcp.pop %v802
    %v804 = vmul.f32 1.0, %v803
    %v805 = vadd.f32 %v788, %v108
    %v806 = vmul.f32 %v797, %v805
    %v807 = vadd.f32 %v649, %v806
    %v808 = vtanh.pop %v807
    %v809 = vsub.f32 1.0, %v804
    %v810 = vmul.f32 %v809, %v808
    %v811 = vmul.f32 %v804, %v645
    %v812 = vadd.f32 %v810, %v811
    %s813 = sadd.s32 %s110, 3
    %v814 = vstv %s813
    %vm815 = vcmp.lt.s32.totalorder %v814, %v54
    %v816 = vsel %vm815, 1, 0
    %817 = vset.pattern.permute.xlu0 0
    %818 = vperm.xlu0 %817, %v816
    %v819 = vpop.permute.xlu0 %818
    %vm820 = vcmp.eq.s32.totalorder %v819, 1
    %v821 = vsel %vm820, %v812, 0.0
    %s822 = scalar_lea.vmem [#allocation8], 24
    %823 = vst [vmem:[%s822] sm:$0xff] %v821
    %v824 = vsel %vm820, %v812, %v645
    %s825 = scalar_lea.vmem [#allocation3], 96
    %v826 = vld [vmem:[%s825] sm:$0xff]
    %v827 = vld [vmem:[%s825 + $0x8] sm:$0xff]
    %v828 = vld [vmem:[%s825 + $0x10] sm:$0xff]
    %829 = vmatprep.subr.mxu0 %v101
    %830 = vmatpush1.msra.mxu0 %v100
    %831 = vmatprep.subr.mxu0 %v98
    %832 = vmatpush1.msra.mxu0 %v97
    %833 = vmatprep.subr.mxu0 %v95
    %834 = vmatpush1.msra.mxu0 %v94
    %835 = vmatprep.subr.mxu0 %v92
    %836 = vmatpush1.msra.mxu0 %v91
    %837 = vmatprep.subr.mxu0 %v89
    %838 = vmatpush1.msra.mxu0 %v88
    %839 = vmatprep.subr.mxu0 %v86
    %840 = vmatpush1.msra.mxu0 %v85
    %841 = vmatprep.subr.mxu0 %v83
    %842 = vmatpush1.msra.mxu0 %v82
    %843 = vmatprep.subr.mxu0 %v80
    %844 = vmatpush1.msra.mxu0 %v79
    %845 = vmatprep.subr.mxu0 %v77
    %846 = vmatpush1.msra.mxu0 %v76
    %847 = vmatprep.subr.mxu0 %v74
    %848 = vmatpush1.msra.mxu0 %v73
    %849 = vmatprep.subr.mxu0 %v71
    %850 = vmatpush1.msra.mxu0 %v70
    %851 = vmatprep.subr.mxu0 %v68
    %852 = vmatpush1.msra.mxu0 %v67
    %853 = vmatprep.subr.mxu0 %v65
    %854 = vmatpush1.msra.mxu0 %v64
    %855 = vmatprep.subr.mxu0 %v62
    %856 = vmatpush1.msra.mxu0 %v61
    %857 = vmatprep.subr.mxu0 %v59
    %858 = vmatpush1.msra.mxu0 %v58
    %859 = vmatprep.subr.mxu0 %v56
    %860 = vmatpush1.msra.mxu0 %v55
    %861 = vmatprep.subr.mxu0 0.0
    %862 = vmatpush2.msra.mxu0 0.0
    %863 = vmatprep.subr.mxu0 0.0
    %864 = vmatpush2.msra.mxu0 0.0
    %865 = vmatprep.subr.mxu0 0.0
    %866 = vmatpush2.msra.mxu0 0.0
    %867 = vmatprep.subr.mxu0 0.0
    %868 = vmatpush2.msra.mxu0 0.0
    %869 = vmatprep.subr.mxu0 0.0
    %870 = vmatpush2.msra.mxu0 0.0
    %871 = vmatprep.subr.mxu0 0.0
    %872 = vmatpush2.msra.mxu0 0.0
    %873 = vmatprep.subr.mxu0 0.0
    %874 = vmatpush2.msra.mxu0 0.0
    %875 = vmatprep.subr.mxu0 0.0
    %876 = vmatpush2.msra.mxu0 0.0
    %877 = vmatprep.subr.mxu0 0.0
    %878 = vmatpush2.msra.mxu0 0.0
    %879 = vmatprep.subr.mxu0 0.0
    %880 = vmatpush2.msra.mxu0 0.0
    %881 = vmatprep.subr.mxu0 0.0
    %882 = vmatpush2.msra.mxu0 0.0
    %883 = vmatprep.subr.mxu0 0.0
    %884 = vmatpush2.msra.mxu0 0.0
    %885 = vmatprep.subr.mxu0 0.0
    %886 = vmatpush2.msra.mxu0 0.0
    %887 = vmatprep.subr.mxu0 0.0
    %888 = vmatpush2.msra.mxu0 0.0
    %889 = vmatprep.subr.mxu0 0.0
    %890 = vmatpush2.msra.mxu0 0.0
    %891 = vmatprep.subr.mxu0 0.0
    %892 = vmatpush2.msra.mxu0 0.0
    %893 = vmatprep.mubr.f32.mxu0 0.0
    %894 = vmatmul.mubr.f32.gmra.mxu0 %v824
    %v895 = vpop.f32.mrf.mxu0
    %v896 = vadd.f32 0.0, %v895
    %v897 = vpop.f32.mrf.mxu0
    %v898 = vadd.f32 0.0, %v897
    %899 = vdwg.mxu0
    %900 = vmatprep.subr.mxu0 0.0
    %901 = vmatpush1.msra.mxu0 %v102
    %902 = vmatprep.subr.mxu0 0.0
    %903 = vmatpush1.msra.mxu0 %v99
    %904 = vmatprep.subr.mxu0 0.0
    %905 = vmatpush1.msra.mxu0 %v96
    %906 = vmatprep.subr.mxu0 0.0
    %907 = vmatpush1.msra.mxu0 %v93
    %908 = vmatprep.subr.mxu0 0.0
    %909 = vmatpush1.msra.mxu0 %v90
    %910 = vmatprep.subr.mxu0 0.0
    %911 = vmatpush1.msra.mxu0 %v87
    %912 = vmatprep.subr.mxu0 0.0
    %913 = vmatpush1.msra.mxu0 %v84
    %914 = vmatprep.subr.mxu0 0.0
    %915 = vmatpush1.msra.mxu0 %v81
    %916 = vmatprep.subr.mxu0 0.0
    %917 = vmatpush1.msra.mxu0 %v78
    %918 = vmatprep.subr.mxu0 0.0
    %919 = vmatpush1.msra.mxu0 %v75
    %920 = vmatprep.subr.mxu0 0.0
    %921 = vmatpush1.msra.mxu0 %v72
    %922 = vmatprep.subr.mxu0 0.0
    %923 = vmatpush1.msra.mxu0 %v69
    %924 = vmatprep.subr.mxu0 0.0
    %925 = vmatpush1.msra.mxu0 %v66
    %926 = vmatprep.subr.mxu0 0.0
    %927 = vmatpush1.msra.mxu0 %v63
    %928 = vmatprep.subr.mxu0 0.0
    %929 = vmatpush1.msra.mxu0 %v60
    %930 = vmatprep.subr.mxu0 0.0
    %931 = vmatpush1.msra.mxu0 %v57
    %932 = vmatprep.subr.mxu0 0.0
    %933 = vmatpush2.msra.mxu0 0.0
    %934 = vmatprep.subr.mxu0 0.0
    %935 = vmatpush2.msra.mxu0 0.0
    %936 = vmatprep.subr.mxu0 0.0
    %937 = vmatpush2.msra.mxu0 0.0
    %938 = vmatprep.subr.mxu0 0.0
    %939 = vmatpush2.msra.mxu0 0.0
    %940 = vmatprep.subr.mxu0 0.0
    %941 = vmatpush2.msra.mxu0 0.0
    %942 = vmatprep.subr.mxu0 0.0
    %943 = vmatpush2.msra.mxu0 0.0
    %944 = vmatprep.subr.mxu0 0.0
    %945 = vmatpush2.msra.mxu0 0.0
    %946 = vmatprep.subr.mxu0 0.0
    %947 = vmatpush2.msra.mxu0 0.0
    %948 = vmatprep.subr.mxu0 0.0
    %949 = vmatpush2.msra.mxu0 0.0
    %950 = vmatprep.subr.mxu0 0.0
    %951 = vmatpush2.msra.mxu0 0.0
    %952 = vmatprep.subr.mxu0 0.0
    %953 = vmatpush2.msra.mxu0 0.0
    %954 = vmatprep.subr.mxu0 0.0
    %955 = vmatpush2.msra.mxu0 0.0
    %956 = vmatprep.subr.mxu0 0.0
    %957 = vmatpush2.msra.mxu0 0.0
    %958 = vmatprep.subr.mxu0 0.0
    %959 = vmatpush2.msra.mxu0 0.0
    %960 = vmatprep.subr.mxu0 0.0
    %961 = vmatpush2.msra.mxu0 0.0
    %962 = vmatprep.subr.mxu0 0.0
    %963 = vmatpush2.msra.mxu0 0.0
    %964 = vmatprep.mubr.f32.mxu0 0.0
    %965 = vmatmul.mubr.f32.gmra.mxu0 %v824
    %v966 = vpop.f32.mrf.mxu0
    %v967 = vadd.f32 0.0, %v966
    %v968 = vpop.f32.mrf.mxu0
    %969 = vdwg.mxu0
    %v970 = vadd.f32 %v826, %v896
    %v971 = vxor.u32 %v970, 2147483648
    %v972 = vmul.f32 %v971, 1.442695
    %v973 = vpow.pop %v972
    %v974 = vadd.f32 %v973, 1.0
    %v975 = vrcp.pop %v974
    %v976 = vmul.f32 1.0, %v975
    %v977 = vadd.f32 %v827, %v898
    %v978 = vxor.u32 %v977, 2147483648
    %v979 = vmul.f32 %v978, 1.442695
    %v980 = vpow.pop %v979
    %v981 = vadd.f32 %v980, 1.0
    %v982 = vrcp.pop %v981
    %v983 = vmul.f32 1.0, %v982
    %v984 = vadd.f32 %v967, %v108
    %v985 = vmul.f32 %v976, %v984
    %v986 = vadd.f32 %v828, %v985
    %v987 = vtanh.pop %v986
    %v988 = vsub.f32 1.0, %v983
    %v989 = vmul.f32 %v988, %v987
    %v990 = vmul.f32 %v983, %v824
    %v991 = vadd.f32 %v989, %v990
    %s992 = sadd.s32 %s110, 4
    %v993 = vstv %s992
    %vm994 = vcmp.lt.s32.totalorder %v993, %v54
    %v995 = vsel %vm994, 1, 0
    %996 = vset.pattern.permute.xlu0 0
    %997 = vperm.xlu0 %996, %v995
    %v998 = vpop.permute.xlu0 %997
    %vm999 = vcmp.eq.s32.totalorder %v998, 1
    %v1000 = vsel %vm999, %v991, 0.0
    %s1001 = scalar_lea.vmem [#allocation8], 32
    %1002 = vst [vmem:[%s1001] sm:$0xff] %v1000
    %v1003 = vsel %vm999, %v991, %v824
    %s1004 = scalar_lea.vmem [#allocation3], 120
    %v1005 = vld [vmem:[%s1004] sm:$0xff]
    %v1006 = vld [vmem:[%s1004 + $0x8] sm:$0xff]
    %v1007 = vld [vmem:[%s1004 + $0x10] sm:$0xff]
    %1008 = vmatprep.subr.mxu0 %v101
    %1009 = vmatpush1.msra.mxu0 %v100
    %1010 = vmatprep.subr.mxu0 %v98
    %1011 = vmatpush1.msra.mxu0 %v97
    %1012 = vmatprep.subr.mxu0 %v95
    %1013 = vmatpush1.msra.mxu0 %v94
    %1014 = vmatprep.subr.mxu0 %v92
    %1015 = vmatpush1.msra.mxu0 %v91
    %1016 = vmatprep.subr.mxu0 %v89
    %1017 = vmatpush1.msra.mxu0 %v88
    %1018 = vmatprep.subr.mxu0 %v86
    %1019 = vmatpush1.msra.mxu0 %v85
    %1020 = vmatprep.subr.mxu0 %v83
    %1021 = vmatpush1.msra.mxu0 %v82
    %1022 = vmatprep.subr.mxu0 %v80
    %1023 = vmatpush1.msra.mxu0 %v79
    %1024 = vmatprep.subr.mxu0 %v77
    %1025 = vmatpush1.msra.mxu0 %v76
    %1026 = vmatprep.subr.mxu0 %v74
    %1027 = vmatpush1.msra.mxu0 %v73
    %1028 = vmatprep.subr.mxu0 %v71
    %1029 = vmatpush1.msra.mxu0 %v70
    %1030 = vmatprep.subr.mxu0 %v68
    %1031 = vmatpush1.msra.mxu0 %v67
    %1032 = vmatprep.subr.mxu0 %v65
    %1033 = vmatpush1.msra.mxu0 %v64
    %1034 = vmatprep.subr.mxu0 %v62
    %1035 = vmatpush1.msra.mxu0 %v61
    %1036 = vmatprep.subr.mxu0 %v59
    %1037 = vmatpush1.msra.mxu0 %v58
    %1038 = vmatprep.subr.mxu0 %v56
    %1039 = vmatpush1.msra.mxu0 %v55
    %1040 = vmatprep.subr.mxu0 0.0
    %1041 = vmatpush2.msra.mxu0 0.0
    %1042 = vmatprep.subr.mxu0 0.0
    %1043 = vmatpush2.msra.mxu0 0.0
    %1044 = vmatprep.subr.mxu0 0.0
    %1045 = vmatpush2.msra.mxu0 0.0
    %1046 = vmatprep.subr.mxu0 0.0
    %1047 = vmatpush2.msra.mxu0 0.0
    %1048 = vmatprep.subr.mxu0 0.0
    %1049 = vmatpush2.msra.mxu0 0.0
    %1050 = vmatprep.subr.mxu0 0.0
    %1051 = vmatpush2.msra.mxu0 0.0
    %1052 = vmatprep.subr.mxu0 0.0
    %1053 = vmatpush2.msra.mxu0 0.0
    %1054 = vmatprep.subr.mxu0 0.0
    %1055 = vmatpush2.msra.mxu0 0.0
    %1056 = vmatprep.subr.mxu0 0.0
    %1057 = vmatpush2.msra.mxu0 0.0
    %1058 = vmatprep.subr.mxu0 0.0
    %1059 = vmatpush2.msra.mxu0 0.0
    %1060 = vmatprep.subr.mxu0 0.0
    %1061 = vmatpush2.msra.mxu0 0.0
    %1062 = vmatprep.subr.mxu0 0.0
    %1063 = vmatpush2.msra.mxu0 0.0
    %1064 = vmatprep.subr.mxu0 0.0
    %1065 = vmatpush2.msra.mxu0 0.0
    %1066 = vmatprep.subr.mxu0 0.0
    %1067 = vmatpush2.msra.mxu0 0.0
    %1068 = vmatprep.subr.mxu0 0.0
    %1069 = vmatpush2.msra.mxu0 0.0
    %1070 = vmatprep.subr.mxu0 0.0
    %1071 = vmatpush2.msra.mxu0 0.0
    %1072 = vmatprep.mubr.f32.mxu0 0.0
    %1073 = vmatmul.mubr.f32.gmra.mxu0 %v1003
    %v1074 = vpop.f32.mrf.mxu0
    %v1075 = vadd.f32 0.0, %v1074
    %v1076 = vpop.f32.mrf.mxu0
    %v1077 = vadd.f32 0.0, %v1076
    %1078 = vdwg.mxu0
    %1079 = vmatprep.subr.mxu0 0.0
    %1080 = vmatpush1.msra.mxu0 %v102
    %1081 = vmatprep.subr.mxu0 0.0
    %1082 = vmatpush1.msra.mxu0 %v99
    %1083 = vmatprep.subr.mxu0 0.0
    %1084 = vmatpush1.msra.mxu0 %v96
    %1085 = vmatprep.subr.mxu0 0.0
    %1086 = vmatpush1.msra.mxu0 %v93
    %1087 = vmatprep.subr.mxu0 0.0
    %1088 = vmatpush1.msra.mxu0 %v90
    %1089 = vmatprep.subr.mxu0 0.0
    %1090 = vmatpush1.msra.mxu0 %v87
    %1091 = vmatprep.subr.mxu0 0.0
    %1092 = vmatpush1.msra.mxu0 %v84
    %1093 = vmatprep.subr.mxu0 0.0
    %1094 = vmatpush1.msra.mxu0 %v81
    %1095 = vmatprep.subr.mxu0 0.0
    %1096 = vmatpush1.msra.mxu0 %v78
    %1097 = vmatprep.subr.mxu0 0.0
    %1098 = vmatpush1.msra.mxu0 %v75
    %1099 = vmatprep.subr.mxu0 0.0
    %1100 = vmatpush1.msra.mxu0 %v72
    %1101 = vmatprep.subr.mxu0 0.0
    %1102 = vmatpush1.msra.mxu0 %v69
    %1103 = vmatprep.subr.mxu0 0.0
    %1104 = vmatpush1.msra.mxu0 %v66
    %1105 = vmatprep.subr.mxu0 0.0
    %1106 = vmatpush1.msra.mxu0 %v63
    %1107 = vmatprep.subr.mxu0 0.0
    %1108 = vmatpush1.msra.mxu0 %v60
    %1109 = vmatprep.subr.mxu0 0.0
    %1110 = vmatpush1.msra.mxu0 %v57
    %1111 = vmatprep.subr.mxu0 0.0
    %1112 = vmatpush2.msra.mxu0 0.0
    %1113 = vmatprep.subr.mxu0 0.0
    %1114 = vmatpush2.msra.mxu0 0.0
    %1115 = vmatprep.subr.mxu0 0.0
    %1116 = vmatpush2.msra.mxu0 0.0
    %1117 = vmatprep.subr.mxu0 0.0
    %1118 = vmatpush2.msra.mxu0 0.0
    %1119 = vmatprep.subr.mxu0 0.0
    %1120 = vmatpush2.msra.mxu0 0.0
    %1121 = vmatprep.subr.mxu0 0.0
    %1122 = vmatpush2.msra.mxu0 0.0
    %1123 = vmatprep.subr.mxu0 0.0
    %1124 = vmatpush2.msra.mxu0 0.0
    %1125 = vmatprep.subr.mxu0 0.0
    %1126 = vmatpush2.msra.mxu0 0.0
    %1127 = vmatprep.subr.mxu0 0.0
    %1128 = vmatpush2.msra.mxu0 0.0
    %1129 = vmatprep.subr.mxu0 0.0
    %1130 = vmatpush2.msra.mxu0 0.0
    %1131 = vmatprep.subr.mxu0 0.0
    %1132 = vmatpush2.msra.mxu0 0.0
    %1133 = vmatprep.subr.mxu0 0.0
    %1134 = vmatpush2.msra.mxu0 0.0
    %1135 = vmatprep.subr.mxu0 0.0
    %1136 = vmatpush2.msra.mxu0 0.0
    %1137 = vmatprep.subr.mxu0 0.0
    %1138 = vmatpush2.msra.mxu0 0.0
    %1139 = vmatprep.subr.mxu0 0.0
    %1140 = vmatpush2.msra.mxu0 0.0
    %1141 = vmatprep.subr.mxu0 0.0
    %1142 = vmatpush2.msra.mxu0 0.0
    %1143 = vmatprep.mubr.f32.mxu0 0.0
    %1144 = vmatmul.mubr.f32.gmra.mxu0 %v1003
    %v1145 = vpop.f32.mrf.mxu0
    %v1146 = vadd.f32 0.0, %v1145
    %v1147 = vpop.f32.mrf.mxu0
    %1148 = vdwg.mxu0
    %v1149 = vadd.f32 %v1005, %v1075
    %v1150 = vxor.u32 %v1149, 2147483648
    %v1151 = vmul.f32 %v1150, 1.442695
    %v1152 = vpow.pop %v1151
    %v1153 = vadd.f32 %v1152, 1.0
    %v1154 = vrcp.pop %v1153
    %v1155 = vmul.f32 1.0, %v1154
    %v1156 = vadd.f32 %v1006, %v1077
    %v1157 = vxor.u32 %v1156, 2147483648
    %v1158 = vmul.f32 %v1157, 1.442695
    %v1159 = vpow.pop %v1158
    %v1160 = vadd.f32 %v1159, 1.0
    %v1161 = vrcp.pop %v1160
    %v1162 = vmul.f32 1.0, %v1161
    %v1163 = vadd.f32 %v1146, %v108
    %v1164 = vmul.f32 %v1155, %v1163
    %v1165 = vadd.f32 %v1007, %v1164
    %v1166 = vtanh.pop %v1165
    %v1167 = vsub.f32 1.0, %v1162
    %v1168 = vmul.f32 %v1167, %v1166
    %v1169 = vmul.f32 %v1162, %v1003
    %v1170 = vadd.f32 %v1168, %v1169
    %s1171 = sadd.s32 %s110, 5
    %v1172 = vstv %s1171
    %vm1173 = vcmp.lt.s32.totalorder %v1172, %v54
    %v1174 = vsel %vm1173, 1, 0
    %1175 = vset.pattern.permute.xlu0 0
    %1176 = vperm.xlu0 %1175, %v1174
    %v1177 = vpop.permute.xlu0 %1176
    %vm1178 = vcmp.eq.s32.totalorder %v1177, 1
    %v1179 = vsel %vm1178, %v1170, 0.0
    %s1180 = scalar_lea.vmem [#allocation8], 40
    %1181 = vst [vmem:[%s1180] sm:$0xff] %v1179
    %v1182 = vsel %vm1178, %v1170, %v1003
    %s1183 = scalar_lea.vmem [#allocation3], 144
    %v1184 = vld [vmem:[%s1183] sm:$0xff]
    %v1185 = vld [vmem:[%s1183 + $0x8] sm:$0xff]
    %v1186 = vld [vmem:[%s1183 + $0x10] sm:$0xff]
    %1187 = vmatprep.subr.mxu0 %v101
    %1188 = vmatpush1.msra.mxu0 %v100
    %1189 = vmatprep.subr.mxu0 %v98
    %1190 = vmatpush1.msra.mxu0 %v97
    %1191 = vmatprep.subr.mxu0 %v95
    %1192 = vmatpush1.msra.mxu0 %v94
    %1193 = vmatprep.subr.mxu0 %v92
    %1194 = vmatpush1.msra.mxu0 %v91
    %1195 = vmatprep.subr.mxu0 %v89
    %1196 = vmatpush1.msra.mxu0 %v88
    %1197 = vmatprep.subr.mxu0 %v86
    %1198 = vmatpush1.msra.mxu0 %v85
    %1199 = vmatprep.subr.mxu0 %v83
    %1200 = vmatpush1.msra.mxu0 %v82
    %1201 = vmatprep.subr.mxu0 %v80
    %1202 = vmatpush1.msra.mxu0 %v79
    %1203 = vmatprep.subr.mxu0 %v77
    %1204 = vmatpush1.msra.mxu0 %v76
    %1205 = vmatprep.subr.mxu0 %v74
    %1206 = vmatpush1.msra.mxu0 %v73
    %1207 = vmatprep.subr.mxu0 %v71
    %1208 = vmatpush1.msra.mxu0 %v70
    %1209 = vmatprep.subr.mxu0 %v68
    %1210 = vmatpush1.msra.mxu0 %v67
    %1211 = vmatprep.subr.mxu0 %v65
    %1212 = vmatpush1.msra.mxu0 %v64
    %1213 = vmatprep.subr.mxu0 %v62
    %1214 = vmatpush1.msra.mxu0 %v61
    %1215 = vmatprep.subr.mxu0 %v59
    %1216 = vmatpush1.msra.mxu0 %v58
    %1217 = vmatprep.subr.mxu0 %v56
    %1218 = vmatpush1.msra.mxu0 %v55
    %1219 = vmatprep.subr.mxu0 0.0
    %1220 = vmatpush2.msra.mxu0 0.0
    %1221 = vmatprep.subr.mxu0 0.0
    %1222 = vmatpush2.msra.mxu0 0.0
    %1223 = vmatprep.subr.mxu0 0.0
    %1224 = vmatpush2.msra.mxu0 0.0
    %1225 = vmatprep.subr.mxu0 0.0
    %1226 = vmatpush2.msra.mxu0 0.0
    %1227 = vmatprep.subr.mxu0 0.0
    %1228 = vmatpush2.msra.mxu0 0.0
    %1229 = vmatprep.subr.mxu0 0.0
    %1230 = vmatpush2.msra.mxu0 0.0
    %1231 = vmatprep.subr.mxu0 0.0
    %1232 = vmatpush2.msra.mxu0 0.0
    %1233 = vmatprep.subr.mxu0 0.0
    %1234 = vmatpush2.msra.mxu0 0.0
    %1235 = vmatprep.subr.mxu0 0.0
    %1236 = vmatpush2.msra.mxu0 0.0
    %1237 = vmatprep.subr.mxu0 0.0
    %1238 = vmatpush2.msra.mxu0 0.0
    %1239 = vmatprep.subr.mxu0 0.0
    %1240 = vmatpush2.msra.mxu0 0.0
    %1241 = vmatprep.subr.mxu0 0.0
    %1242 = vmatpush2.msra.mxu0 0.0
    %1243 = vmatprep.subr.mxu0 0.0
    %1244 = vmatpush2.msra.mxu0 0.0
    %1245 = vmatprep.subr.mxu0 0.0
    %1246 = vmatpush2.msra.mxu0 0.0
    %1247 = vmatprep.subr.mxu0 0.0
    %1248 = vmatpush2.msra.mxu0 0.0
    %1249 = vmatprep.subr.mxu0 0.0
    %1250 = vmatpush2.msra.mxu0 0.0
    %1251 = vmatprep.mubr.f32.mxu0 0.0
    %1252 = vmatmul.mubr.f32.gmra.mxu0 %v1182
    %v1253 = vpop.f32.mrf.mxu0
    %v1254 = vadd.f32 0.0, %v1253
    %v1255 = vpop.f32.mrf.mxu0
    %v1256 = vadd.f32 0.0, %v1255
    %1257 = vdwg.mxu0
    %1258 = vmatprep.subr.mxu0 0.0
    %1259 = vmatpush1.msra.mxu0 %v102
    %1260 = vmatprep.subr.mxu0 0.0
    %1261 = vmatpush1.msra.mxu0 %v99
    %1262 = vmatprep.subr.mxu0 0.0
    %1263 = vmatpush1.msra.mxu0 %v96
    %1264 = vmatprep.subr.mxu0 0.0
    %1265 = vmatpush1.msra.mxu0 %v93
    %1266 = vmatprep.subr.mxu0 0.0
    %1267 = vmatpush1.msra.mxu0 %v90
    %1268 = vmatprep.subr.mxu0 0.0
    %1269 = vmatpush1.msra.mxu0 %v87
    %1270 = vmatprep.subr.mxu0 0.0
    %1271 = vmatpush1.msra.mxu0 %v84
    %1272 = vmatprep.subr.mxu0 0.0
    %1273 = vmatpush1.msra.mxu0 %v81
    %1274 = vmatprep.subr.mxu0 0.0
    %1275 = vmatpush1.msra.mxu0 %v78
    %1276 = vmatprep.subr.mxu0 0.0
    %1277 = vmatpush1.msra.mxu0 %v75
    %1278 = vmatprep.subr.mxu0 0.0
    %1279 = vmatpush1.msra.mxu0 %v72
    %1280 = vmatprep.subr.mxu0 0.0
    %1281 = vmatpush1.msra.mxu0 %v69
    %1282 = vmatprep.subr.mxu0 0.0
    %1283 = vmatpush1.msra.mxu0 %v66
    %1284 = vmatprep.subr.mxu0 0.0
    %1285 = vmatpush1.msra.mxu0 %v63
    %1286 = vmatprep.subr.mxu0 0.0
    %1287 = vmatpush1.msra.mxu0 %v60
    %1288 = vmatprep.subr.mxu0 0.0
    %1289 = vmatpush1.msra.mxu0 %v57
    %1290 = vmatprep.subr.mxu0 0.0
    %1291 = vmatpush2.msra.mxu0 0.0
    %1292 = vmatprep.subr.mxu0 0.0
    %1293 = vmatpush2.msra.mxu0 0.0
    %1294 = vmatprep.subr.mxu0 0.0
    %1295 = vmatpush2.msra.mxu0 0.0
    %1296 = vmatprep.subr.mxu0 0.0
    %1297 = vmatpush2.msra.mxu0 0.0
    %1298 = vmatprep.subr.mxu0 0.0
    %1299 = vmatpush2.msra.mxu0 0.0
    %1300 = vmatprep.subr.mxu0 0.0
    %1301 = vmatpush2.msra.mxu0 0.0
    %1302 = vmatprep.subr.mxu0 0.0
    %1303 = vmatpush2.msra.mxu0 0.0
    %1304 = vmatprep.subr.mxu0 0.0
    %1305 = vmatpush2.msra.mxu0 0.0
    %1306 = vmatprep.subr.mxu0 0.0
    %1307 = vmatpush2.msra.mxu0 0.0
    %1308 = vmatprep.subr.mxu0 0.0
    %1309 = vmatpush2.msra.mxu0 0.0
    %1310 = vmatprep.subr.mxu0 0.0
    %1311 = vmatpush2.msra.mxu0 0.0
    %1312 = vmatprep.subr.mxu0 0.0
    %1313 = vmatpush2.msra.mxu0 0.0
    %1314 = vmatprep.subr.mxu0 0.0
    %1315 = vmatpush2.msra.mxu0 0.0
    %1316 = vmatprep.subr.mxu0 0.0
    %1317 = vmatpush2.msra.mxu0 0.0
    %1318 = vmatprep.subr.mxu0 0.0
    %1319 = vmatpush2.msra.mxu0 0.0
    %1320 = vmatprep.subr.mxu0 0.0
    %1321 = vmatpush2.msra.mxu0 0.0
    %1322 = vmatprep.mubr.f32.mxu0 0.0
    %1323 = vmatmul.mubr.f32.gmra.mxu0 %v1182
    %v1324 = vpop.f32.mrf.mxu0
    %v1325 = vadd.f32 0.0, %v1324
    %v1326 = vpop.f32.mrf.mxu0
    %1327 = vdwg.mxu0
    %v1328 = vadd.f32 %v1184, %v1254
    %v1329 = vxor.u32 %v1328, 2147483648
    %v1330 = vmul.f32 %v1329, 1.442695
    %v1331 = vpow.pop %v1330
    %v1332 = vadd.f32 %v1331, 1.0
    %v1333 = vrcp.pop %v1332
    %v1334 = vmul.f32 1.0, %v1333
    %v1335 = vadd.f32 %v1185, %v1256
    %v1336 = vxor.u32 %v1335, 2147483648
    %v1337 = vmul.f32 %v1336, 1.442695
    %v1338 = vpow.pop %v1337
    %v1339 = vadd.f32 %v1338, 1.0
    %v1340 = vrcp.pop %v1339
    %v1341 = vmul.f32 1.0, %v1340
    %v1342 = vadd.f32 %v1325, %v108
    %v1343 = vmul.f32 %v1334, %v1342
    %v1344 = vadd.f32 %v1186, %v1343
    %v1345 = vtanh.pop %v1344
    %v1346 = vsub.f32 1.0, %v1341
    %v1347 = vmul.f32 %v1346, %v1345
    %v1348 = vmul.f32 %v1341, %v1182
    %v1349 = vadd.f32 %v1347, %v1348
    %s1350 = sadd.s32 %s110, 6
    %v1351 = vstv %s1350
    %vm1352 = vcmp.lt.s32.totalorder %v1351, %v54
    %v1353 = vsel %vm1352, 1, 0
    %1354 = vset.pattern.permute.xlu0 0
    %1355 = vperm.xlu0 %1354, %v1353
    %v1356 = vpop.permute.xlu0 %1355
    %vm1357 = vcmp.eq.s32.totalorder %v1356, 1
    %v1358 = vsel %vm1357, %v1349, 0.0
    %s1359 = scalar_lea.vmem [#allocation8], 48
    %1360 = vst [vmem:[%s1359] sm:$0xff] %v1358
    %v1361 = vsel %vm1357, %v1349, %v1182
    %s1362 = scalar_lea.vmem [#allocation3], 168
    %v1363 = vld [vmem:[%s1362] sm:$0xff]
    %v1364 = vld [vmem:[%s1362 + $0x8] sm:$0xff]
    %v1365 = vld [vmem:[%s1362 + $0x10] sm:$0xff]
    %1366 = vmatprep.subr.mxu0 %v101
    %1367 = vmatpush1.msra.mxu0 %v100
    %1368 = vmatprep.subr.mxu0 %v98
    %1369 = vmatpush1.msra.mxu0 %v97
    %1370 = vmatprep.subr.mxu0 %v95
    %1371 = vmatpush1.msra.mxu0 %v94
    %1372 = vmatprep.subr.mxu0 %v92
    %1373 = vmatpush1.msra.mxu0 %v91
    %1374 = vmatprep.subr.mxu0 %v89
    %1375 = vmatpush1.msra.mxu0 %v88
    %1376 = vmatprep.subr.mxu0 %v86
    %1377 = vmatpush1.msra.mxu0 %v85
    %1378 = vmatprep.subr.mxu0 %v83
    %1379 = vmatpush1.msra.mxu0 %v82
    %1380 = vmatprep.subr.mxu0 %v80
    %1381 = vmatpush1.msra.mxu0 %v79
    %1382 = vmatprep.subr.mxu0 %v77
    %1383 = vmatpush1.msra.mxu0 %v76
    %1384 = vmatprep.subr.mxu0 %v74
    %1385 = vmatpush1.msra.mxu0 %v73
    %1386 = vmatprep.subr.mxu0 %v71
    %1387 = vmatpush1.msra.mxu0 %v70
    %1388 = vmatprep.subr.mxu0 %v68
    %1389 = vmatpush1.msra.mxu0 %v67
    %1390 = vmatprep.subr.mxu0 %v65
    %1391 = vmatpush1.msra.mxu0 %v64
    %1392 = vmatprep.subr.mxu0 %v62
    %1393 = vmatpush1.msra.mxu0 %v61
    %1394 = vmatprep.subr.mxu0 %v59
    %1395 = vmatpush1.msra.mxu0 %v58
    %1396 = vmatprep.subr.mxu0 %v56
    %1397 = vmatpush1.msra.mxu0 %v55
    %1398 = vmatprep.subr.mxu0 0.0
    %1399 = vmatpush2.msra.mxu0 0.0
    %1400 = vmatprep.subr.mxu0 0.0
    %1401 = vmatpush2.msra.mxu0 0.0
    %1402 = vmatprep.subr.mxu0 0.0
    %1403 = vmatpush2.msra.mxu0 0.0
    %1404 = vmatprep.subr.mxu0 0.0
    %1405 = vmatpush2.msra.mxu0 0.0
    %1406 = vmatprep.subr.mxu0 0.0
    %1407 = vmatpush2.msra.mxu0 0.0
    %1408 = vmatprep.subr.mxu0 0.0
    %1409 = vmatpush2.msra.mxu0 0.0
    %1410 = vmatprep.subr.mxu0 0.0
    %1411 = vmatpush2.msra.mxu0 0.0
    %1412 = vmatprep.subr.mxu0 0.0
    %1413 = vmatpush2.msra.mxu0 0.0
    %1414 = vmatprep.subr.mxu0 0.0
    %1415 = vmatpush2.msra.mxu0 0.0
    %1416 = vmatprep.subr.mxu0 0.0
    %1417 = vmatpush2.msra.mxu0 0.0
    %1418 = vmatprep.subr.mxu0 0.0
    %1419 = vmatpush2.msra.mxu0 0.0
    %1420 = vmatprep.subr.mxu0 0.0
    %1421 = vmatpush2.msra.mxu0 0.0
    %1422 = vmatprep.subr.mxu0 0.0
    %1423 = vmatpush2.msra.mxu0 0.0
    %1424 = vmatprep.subr.mxu0 0.0
    %1425 = vmatpush2.msra.mxu0 0.0
    %1426 = vmatprep.subr.mxu0 0.0
    %1427 = vmatpush2.msra.mxu0 0.0
    %1428 = vmatprep.subr.mxu0 0.0
    %1429 = vmatpush2.msra.mxu0 0.0
    %1430 = vmatprep.mubr.f32.mxu0 0.0
    %1431 = vmatmul.mubr.f32.gmra.mxu0 %v1361
    %v1432 = vpop.f32.mrf.mxu0
    %v1433 = vadd.f32 0.0, %v1432
    %v1434 = vpop.f32.mrf.mxu0
    %v1435 = vadd.f32 0.0, %v1434
    %1436 = vdwg.mxu0
    %1437 = vmatprep.subr.mxu0 0.0
    %1438 = vmatpush1.msra.mxu0 %v102
    %1439 = vmatprep.subr.mxu0 0.0
    %1440 = vmatpush1.msra.mxu0 %v99
    %1441 = vmatprep.subr.mxu0 0.0
    %1442 = vmatpush1.msra.mxu0 %v96
    %1443 = vmatprep.subr.mxu0 0.0
    %1444 = vmatpush1.msra.mxu0 %v93
    %1445 = vmatprep.subr.mxu0 0.0
    %1446 = vmatpush1.msra.mxu0 %v90
    %1447 = vmatprep.subr.mxu0 0.0
    %1448 = vmatpush1.msra.mxu0 %v87
    %1449 = vmatprep.subr.mxu0 0.0
    %1450 = vmatpush1.msra.mxu0 %v84
    %1451 = vmatprep.subr.mxu0 0.0
    %1452 = vmatpush1.msra.mxu0 %v81
    %1453 = vmatprep.subr.mxu0 0.0
    %1454 = vmatpush1.msra.mxu0 %v78
    %1455 = vmatprep.subr.mxu0 0.0
    %1456 = vmatpush1.msra.mxu0 %v75
    %1457 = vmatprep.subr.mxu0 0.0
    %1458 = vmatpush1.msra.mxu0 %v72
    %1459 = vmatprep.subr.mxu0 0.0
    %1460 = vmatpush1.msra.mxu0 %v69
    %1461 = vmatprep.subr.mxu0 0.0
    %1462 = vmatpush1.msra.mxu0 %v66
    %1463 = vmatprep.subr.mxu0 0.0
    %1464 = vmatpush1.msra.mxu0 %v63
    %1465 = vmatprep.subr.mxu0 0.0
    %1466 = vmatpush1.msra.mxu0 %v60
    %1467 = vmatprep.subr.mxu0 0.0
    %1468 = vmatpush1.msra.mxu0 %v57
    %1469 = vmatprep.subr.mxu0 0.0
    %1470 = vmatpush2.msra.mxu0 0.0
    %1471 = vmatprep.subr.mxu0 0.0
    %1472 = vmatpush2.msra.mxu0 0.0
    %1473 = vmatprep.subr.mxu0 0.0
    %1474 = vmatpush2.msra.mxu0 0.0
    %1475 = vmatprep.subr.mxu0 0.0
    %1476 = vmatpush2.msra.mxu0 0.0
    %1477 = vmatprep.subr.mxu0 0.0
    %1478 = vmatpush2.msra.mxu0 0.0
    %1479 = vmatprep.subr.mxu0 0.0
    %1480 = vmatpush2.msra.mxu0 0.0
    %1481 = vmatprep.subr.mxu0 0.0
    %1482 = vmatpush2.msra.mxu0 0.0
    %1483 = vmatprep.subr.mxu0 0.0
    %1484 = vmatpush2.msra.mxu0 0.0
    %1485 = vmatprep.subr.mxu0 0.0
    %1486 = vmatpush2.msra.mxu0 0.0
    %1487 = vmatprep.subr.mxu0 0.0
    %1488 = vmatpush2.msra.mxu0 0.0
    %1489 = vmatprep.subr.mxu0 0.0
    %1490 = vmatpush2.msra.mxu0 0.0
    %1491 = vmatprep.subr.mxu0 0.0
    %1492 = vmatpush2.msra.mxu0 0.0
    %1493 = vmatprep.subr.mxu0 0.0
    %1494 = vmatpush2.msra.mxu0 0.0
    %1495 = vmatprep.subr.mxu0 0.0
    %1496 = vmatpush2.msra.mxu0 0.0
    %1497 = vmatprep.subr.mxu0 0.0
    %1498 = vmatpush2.msra.mxu0 0.0
    %1499 = vmatprep.subr.mxu0 0.0
    %1500 = vmatpush2.msra.mxu0 0.0
    %1501 = vmatprep.mubr.f32.mxu0 0.0
    %1502 = vmatmul.mubr.f32.gmra.mxu0 %v1361
    %v1503 = vpop.f32.mrf.mxu0
    %v1504 = vadd.f32 0.0, %v1503
    %v1505 = vpop.f32.mrf.mxu0
    %1506 = vdwg.mxu0
    %v1507 = vadd.f32 %v1363, %v1433
    %v1508 = vxor.u32 %v1507, 2147483648
    %v1509 = vmul.f32 %v1508, 1.442695
    %v1510 = vpow.pop %v1509
    %v1511 = vadd.f32 %v1510, 1.0
    %v1512 = vrcp.pop %v1511
    %v1513 = vmul.f32 1.0, %v1512
    %v1514 = vadd.f32 %v1364, %v1435
    %v1515 = vxor.u32 %v1514, 2147483648
    %v1516 = vmul.f32 %v1515, 1.442695
    %v1517 = vpow.pop %v1516
    %v1518 = vadd.f32 %v1517, 1.0
    %v1519 = vrcp.pop %v1518
    %v1520 = vmul.f32 1.0, %v1519
    %v1521 = vadd.f32 %v1504, %v108
    %v1522 = vmul.f32 %v1513, %v1521
    %v1523 = vadd.f32 %v1365, %v1522
    %v1524 = vtanh.pop %v1523
    %v1525 = vsub.f32 1.0, %v1520
    %v1526 = vmul.f32 %v1525, %v1524
    %v1527 = vmul.f32 %v1520, %v1361
    %v1528 = vadd.f32 %v1526, %v1527
    %s1529 = sadd.s32 %s110, 7
    %v1530 = vstv %s1529
    %vm1531 = vcmp.lt.s32.totalorder %v1530, %v54
    %v1532 = vsel %vm1531, 1, 0
    %1533 = vset.pattern.permute.xlu0 0
    %1534 = vperm.xlu0 %1533, %v1532
    %v1535 = vpop.permute.xlu0 %1534
    %vm1536 = vcmp.eq.s32.totalorder %v1535, 1
    %v1537 = vsel %vm1536, %v1528, 0.0
    %s1538 = scalar_lea.vmem [#allocation8], 56
    %1539 = vst [vmem:[%s1538] sm:$0xff] %v1537
    %v1540 = vsel %vm1536, %v1528, %v1361
    %1541 = vst [vmem:[#allocation2] sm:$0xff] %v1540
    // Predicated region
    $region30: #{tpu_custom_call.1} parent=1 // pred_check
      %p1542 = pneg %p49
    $region31: #{tpu_custom_call.1} parent=1 // pred_check_branch
      %1544 = sbr.rel (%p1542) target = $region33
    $region32: #{tpu_custom_call.1} parent=1 // pred_region
      %1545 = vst [vmem:[#allocation9] sm:$0xff] %v1540
    $region33: #{tpu_custom_call.1} parent=1 // pred_fallthru
      _
    // Predicated region
    $region34: #{tpu_custom_call.1} parent=1 // pred_check
      _
    $region35: #{tpu_custom_call.1} parent=1 // pred_check_branch
      %1547 = sbr.rel (0) target = $region37
    $region36: #{tpu_custom_call.1} parent=1 // pred_region
      %s1549 = ssub.s32 1024, 1024
      %1550 = vsyncadd [#allocation5], %s1549
      %s1551 = sshll.u32 [#allocation8], 4
      %s1552 = int_to_ptr.vmem [resolvable:$true] %s1551
      %1557 = dma.vmem_to_hbm [thread:$0]  %s1552, 1024, %s4, [#allocation5], 128, 128, 8
    $region37: #{tpu_custom_call.1} parent=1 // pred_fallthru
      _
    // Predicated region
    $region38: #{tpu_custom_call.1} parent=1 // pred_check
      _
    $region39: #{tpu_custom_call.1} parent=1 // pred_check_branch
      %1559 = sbr.rel (0) target = $region41
    $region40: #{tpu_custom_call.1} parent=1 // pred_region
      %s1561 = ssub.s32 128, 128
      %1562 = vsyncadd [#allocation10], %s1561
      %s1564 = sshll.u32 [#allocation9], 4
      %s1565 = int_to_ptr.vmem [resolvable:$true] %s1564
      %1567 = dma.vmem_to_hbm [thread:$0]  %s1565, 128, %s5, [#allocation10]
    $region41: #{tpu_custom_call.1} parent=1 // pred_fallthru
      _
    // Predicated region
    $region42: #{tpu_custom_call.1} parent=1 // pred_check
      _
    $region43: #{tpu_custom_call.1} parent=1 // pred_check_branch
      %1569 = sbr.rel (0) target = $region45
    $region44: #{tpu_custom_call.1} parent=1 // pred_region
      %1570 = dma.done [#allocation5], 1024
    $region45: #{tpu_custom_call.1} parent=1 // pred_fallthru
      _
    // Predicated region
    $region46: #{tpu_custom_call.1} parent=1 // pred_check
      _
    $region47: #{tpu_custom_call.1} parent=1 // pred_check_branch
      %1572 = sbr.rel (0) target = $region49
    $region48: #{tpu_custom_call.1} parent=1 // pred_region
      %1573 = dma.done [#allocation10], 128
    $region49: #{tpu_custom_call.1} parent=1 // pred_fallthru
      _
    %1574 = vsyncpa [#allocation4], 1
    %1575 = vsyncpa [#allocation7], 1
    %1576 = vsyncpa [#allocation5], 1
    %1577 = vsyncpa [#allocation10], 1

</llo_original>
